<compile_context>
chip_gen: v6e
topology: v6e:2x2x1
jax: 0.10.0
libtpu: 0.0.40
codegen_flags: <defaults>
</compile_context>

<pallas_src>
import functools

import jax
import jax.numpy as jnp
from jax import lax
from jax.experimental import pallas as pl
from jax.experimental.pallas import tpu as pltpu


def _round_up(x, m):
    return (x + m - 1) // m * m


def rnn_kernel(x_ref, w_ih_ref, w_hh_ref, b_ref, rep_ref, h_ref, *,
               seq_len, t_chunk, mxu_dtype):
    """One (batch-block, time-chunk) grid step of the tanh-RNN recurrence.

    x_ref   : (Tc, Bb, D)   time-major streamed input chunk (auto double-buffered)
    w_ih    : (D,  Hp)      input->hidden weight (pre-transposed, zero-padded)
    w_hh    : (Hp, Hp)      hidden->hidden weight
    b       : (1,  Hp) f32  b_ih + b_hh (folded once into the chunk projection)
    rep_ref : (Bb, Hp) f32  last hidden state (written on the final time chunk)
    h_ref   : (Bb, Hp) f32  VMEM scratch carrying h across time chunks
    """
    t = pl.program_id(1)

    @pl.when(t == 0)
    def _init():
        h_ref[...] = jnp.zeros_like(h_ref)

    # Whole-chunk input projection as ONE tall matmul; bias folded once.
    # Time-major output -> xw[i] below is a dense (Bb, Hp) tile.
    xw = lax.dot_general(
        x_ref[...], w_ih_ref[...],
        dimension_numbers=(((2,), (0,)), ((), ())),
        preferred_element_type=jnp.float32,
    ) + b_ref[...]                                   # (Tc, Bb, Hp) f32

    w_hh = w_hh_ref[...]                             # (Hp, Hp) MXU operand
    h = h_ref[...]                                   # (Bb, Hp) f32 carry

    rem = seq_len % t_chunk
    # Fully unrolled serial recurrence: only h @ W_hh + tanh on the critical path.
    for i in range(t_chunk):
        h_new = jnp.tanh(
            xw[i]
            + jnp.dot(h.astype(mxu_dtype), w_hh,
                      preferred_element_type=jnp.float32))
        if rem != 0 and i >= rem:
            # Only the last chunk's tail steps can be padding (scalar predicate).
            valid = t * t_chunk + i < seq_len
            h = jnp.where(valid, h_new, h)
        else:
            h = h_new
    h_ref[...] = h

    @pl.when(t == pl.num_programs(1) - 1)
    def _finalize():
        rep_ref[...] = h


def rnn_model_forward(x, params, *, t_chunk=None, mxu_dtype=jnp.bfloat16):
    """x: (B, T, D) float32 (batch_first, like the PyTorch module)."""
    B, T, D = x.shape
    H = params["w_hh_t"].shape[0]
    f32 = jnp.float32

    # ---- lane/sublane-friendly padding & generation-aware block sizes ----
    Hp = _round_up(H, 128)

    try:
        kind = jax.devices()[0].device_kind.lower()
    except Exception:  # pragma: no cover
        kind = ""

    if B > 128:
        Bb = 256 if "v6" in kind else 128     # v6e: 2x256^2 MXU likes M=256
        Bp = _round_up(B, Bb)
    else:
        Bp = _round_up(B, 8)
        if B >= 16:
            Bb = _round_up((Bp + 1) // 2, 8)  # n_b == 2 -> feeds both v7x TCs
            Bp = 2 * Bb
        else:
            Bb = Bp
    n_b = Bp // Bb

    if t_chunk is None:
        # Larger chunks amortize the ~0.35us per-grid-step overhead when xw is
        # small; smaller chunks keep the Bb*Tc*Hp*4 xw temp within a few MiB
        # for big H (critical on v7x's 64 MiB VMEM).
        if Hp <= 256:
            t_chunk = 128
        elif Hp <= 512:
            t_chunk = 64
        elif Hp <= 1024:
            t_chunk = 32
        else:
            t_chunk = 16
        t_chunk = min(t_chunk, _round_up(T, 8))
    Tp = _round_up(T, t_chunk)
    n_t = Tp // t_chunk

    # ---- operand prep: time-major x, bf16 MXU operands, zero padding ----
    x_t = jnp.transpose(x.astype(mxu_dtype), (1, 0, 2))       # (T, B, D)
    if (Tp, Bp) != (T, B):
        # Pad only the trailing T/B slack (skipped entirely for aligned shapes).
        x_t = jnp.pad(x_t, ((0, Tp - T), (0, Bp - B), (0, 0)))
    w_ih_p = jnp.zeros((D, Hp), mxu_dtype).at[:, :H].set(
        params["w_ih_t"].astype(mxu_dtype))
    w_hh_p = jnp.zeros((Hp, Hp), mxu_dtype).at[:H, :H].set(
        params["w_hh_t"].astype(mxu_dtype))
    b_p = jnp.zeros((1, Hp), f32).at[:, :H].set(params["b_rnn"].astype(f32))

    kernel = functools.partial(rnn_kernel, seq_len=T, t_chunk=t_chunk,
                               mxu_dtype=mxu_dtype)

    wbytes = jnp.dtype(mxu_dtype).itemsize

    def _vmem_estimate(weight_bufs):
        return int(
            weight_bufs * (D * Hp + Hp * Hp) * wbytes        # resident weights
            + 2 * Hp * 4                                     # bias
            + 2 * t_chunk * Bb * D * wbytes                  # double-buffered x
            + t_chunk * Bb * Hp * 4                          # xw temp
            + 3 * Bb * Hp * 4                                # h scratch + rep
        ) + (4 << 20)                                        # headroom

    def _run(single_buffer_weights):
        def resident(shape):
            idx = lambda b, t: (0,) * len(shape)
            if single_buffer_weights and hasattr(pl, "Buffered"):
                return pl.BlockSpec(shape, idx, pipeline_mode=pl.Buffered(1))
            return pl.BlockSpec(shape, idx)

        vmem_limit = min(
            64 << 20,
            max(32 << 20, _vmem_estimate(1 if single_buffer_weights else 2)))

        rep_p = pl.pallas_call(
            kernel,
            out_shape=jax.ShapeDtypeStruct((Bp, Hp), f32),
            grid=(n_b, n_t),   # time innermost: required by the h_ref carry
            in_specs=[
                pl.BlockSpec((t_chunk, Bb, D), lambda b, t: (t, b, 0)),  # x chunk
                resident((D, Hp)),        # W_ih (resident)
                resident((Hp, Hp)),       # W_hh (resident)
                resident((1, Hp)),        # b_ih + b_hh (resident)
            ],
            out_specs=pl.BlockSpec((Bb, Hp), lambda b, t: (b, 0)),
            scratch_shapes=[pltpu.VMEM((Bb, Hp), f32)],   # hidden-state carry
            compiler_params=pltpu.CompilerParams(
                dimension_semantics=("parallel", "arbitrary"),
                vmem_limit_bytes=vmem_limit),
        )(x_t, w_ih_p, w_hh_p, b_p)
        return jax.block_until_ready(rep_p)

    try:
        rep_p = _run(True)
    except Exception:
        # Single-buffered resident weights unsupported here -> default buffering.
        rep_p = _run(False)

    rep = rep_p[:B, :H].astype(f32)
    # Final Linear as a plain XLA matmul (keeps W_fc out of resident kernel VMEM).
    out = rep @ params["w_fc_t"].astype(f32) + params["b_fc"].astype(f32)
    return rep, out


def init_params(key, input_dim, hidden_dim, output_dim):
    """Deterministic synthetic init mirroring the PyTorch parameter shapes."""
    k = jax.random.split(key, 6)
    s = 1.0 / jnp.sqrt(hidden_dim)
    # PyTorch stores W_ih (H, D), W_hh (H, H), W_fc (O, H); the kernel uses the
    # transposed layout (matmul on the right).
    w_ih = jax.random.uniform(k[0], (hidden_dim, input_dim), jnp.float32, -s, s)
    w_hh = jax.random.uniform(k[1], (hidden_dim, hidden_dim), jnp.float32, -s, s)
    b_ih = jax.random.uniform(k[2], (hidden_dim,), jnp.float32, -s, s)
    b_hh = jax.random.uniform(k[3], (hidden_dim,), jnp.float32, -s, s)
    w_fc = jax.random.uniform(k[4], (output_dim, hidden_dim), jnp.float32, -s, s)
    b_fc = jax.random.uniform(k[5], (output_dim,), jnp.float32, -s, s)
    return {
        "w_ih_t": w_ih.T,                         # (D, H)
        "w_hh_t": w_hh.T,                         # (H, H)
        "b_rnn": (b_ih + b_hh).reshape(1, -1),    # (1, H) combined bias
        "w_fc_t": w_fc.T,                         # (H, O)
        "b_fc": b_fc.reshape(1, -1),              # (1, O)
    }


def reference_forward(x, params):
    """Pure-JAX reference with identical semantics."""
    B, T, D = x.shape
    H = params["w_hh_t"].shape[0]
    h = jnp.zeros((B, H), jnp.float32)
    for t in range(T):
        h = jnp.tanh(x[:, t, :] @ params["w_ih_t"]
                     + h @ params["w_hh_t"] + params["b_rnn"])
    out = h @ params["w_fc_t"] + params["b_fc"]
    return h, out


if __name__ == "__main__":
    B, T, D, H, O = 2, 8, 4, 32, 8   # batch, seq, input_dim, hidden_dim, output_dim

    key = jax.random.PRNGKey(0)
    kx, kp = jax.random.split(key)
    x = jax.random.normal(kx, (B, T, D), jnp.float32)
    params = init_params(kp, D, H, O)

    rep_ref, out_ref = reference_forward(x, params)

    # Exact-semantics validation path (f32 MXU operands).
    rep32, out32 = rnn_model_forward(x, params, mxu_dtype=jnp.float32)
    jax.block_until_ready((rep32, out32))
    assert rep32.shape == (B, H) and out32.shape == (B, O)
    assert jnp.allclose(rep32, rep_ref, atol=1e-5, rtol=1e-5)
    assert jnp.allclose(out32, out_ref, atol=1e-5, rtol=1e-5)

    # Performance path: bf16 MXU operands, f32 accumulation / carry / tanh.
    rep, out = rnn_model_forward(x, params)
    jax.block_until_ready((rep, out))
    assert rep.shape == (B, H) and out.shape == (B, O)
    assert jnp.allclose(rep, rep_ref, atol=5e-2, rtol=5e-2)
    assert jnp.allclose(out, out_ref, atol=5e-2, rtol=5e-2)

    print("KERNEL_OK")
</pallas_src>

<mosaic_0001>
module attributes {stable_mosaic.version = 11 : i64} {
  func.func @rnn_kernel(%arg0: i32, %arg1: i32, %arg2: memref<8x8x4xf32, #tpu.memory_space<vmem>>, %arg3: memref<4x128xf32, #tpu.memory_space<vmem>>, %arg4: memref<128x128xf32, #tpu.memory_space<vmem>>, %arg5: memref<1x128xf32, #tpu.memory_space<vmem>>, %arg6: memref<8x128xf32, #tpu.memory_space<vmem>>, %arg7: memref<8x128xf32, #tpu.memory_space<vmem>>) attributes {dimension_semantics = [#tpu.dimension_semantics<parallel>, #tpu.dimension_semantics<arbitrary>], iteration_bounds = array<i64: 1, 1>, scalar_prefetch = 0 : i64, scratch_operands = 1 : i64, tpu.core_type = #tpu.core_type<tc>, window_params = [{transform_indices = @transform_0, window_bounds = array<i64: 8, 8, 4>}, {pipeline_mode = #tpu.pipeline_mode<synchronous>, transform_indices = @transform_1, window_bounds = array<i64: 4, 128>}, {pipeline_mode = #tpu.pipeline_mode<synchronous>, transform_indices = @transform_2, window_bounds = array<i64: 128, 128>}, {pipeline_mode = #tpu.pipeline_mode<synchronous>, transform_indices = @transform_3, window_bounds = array<i64: 1, 128>}, {transform_indices = @transform_4, window_bounds = array<i64: 8, 128>}]} {
    %c0_i32 = arith.constant 0 : i32
    %0 = arith.cmpi eq, %arg1, %c0_i32 : i32
    %1 = arith.extui %0 : i1 to i32
    %c0_i32_0 = arith.constant 0 : i32
    %2 = arith.cmpi ne, %1, %c0_i32_0 : i32
    scf.if %2 {
      %cst_23 = arith.constant 0.000000e+00 : f32
      %56 = vector.broadcast %cst_23 : f32 to vector<8x128xf32>
      %c0_24 = arith.constant 0 : index
      %c0_25 = arith.constant 0 : index
      %57 = vector.load %arg7[%c0_24, %c0_25] : memref<8x128xf32, #tpu.memory_space<vmem>>, vector<8x128xf32>
      tpu.vector_store %arg7[%c0_24, %c0_25], %56 {strides = array<i32>} : memref<8x128xf32, #tpu.memory_space<vmem>>, vector<8x128xf32>,
    } else {
    }
    %c0 = arith.constant 0 : index
    %c0_1 = arith.constant 0 : index
    %c0_2 = arith.constant 0 : index
    %3 = vector.load %arg2[%c0, %c0_1, %c0_2] : memref<8x8x4xf32, #tpu.memory_space<vmem>>, vector<8x8x4xf32>
    %c0_3 = arith.constant 0 : index
    %c0_4 = arith.constant 0 : index
    %4 = vector.load %arg3[%c0_3, %c0_4] : memref<4x128xf32, #tpu.memory_space<vmem>>, vector<4x128xf32>
    %cst = arith.constant dense<0.000000e+00> : vector<8x8x128xf32>
    %5 = tpu.matmul %3, %4, %cst {dimension_numbers = #tpu.dot_dimension_numbers<[2], [0], [0, 1], [1], [0, 0, 0, 1, 1, 1], [], []>} : vector<8x8x4xf32>, vector<4x128xf32>, vector<8x8x128xf32> -> vector<8x8x128xf32>
    %c0_5 = arith.constant 0 : index
    %c0_6 = arith.constant 0 : index
    %6 = vector.load %arg5[%c0_5, %c0_6] : memref<1x128xf32, #tpu.memory_space<vmem>>, vector<1x128xf32>
    %7 = vector.shape_cast %6 : vector<1x128xf32> to vector<1x1x128xf32>
    %8 = vector.broadcast %7 : vector<1x1x128xf32> to vector<8x8x128xf32>
    %9 = arith.addf %5, %8 : vector<8x8x128xf32>
    %c0_7 = arith.constant 0 : index
    %c0_8 = arith.constant 0 : index
    %10 = vector.load %arg4[%c0_7, %c0_8] : memref<128x128xf32, #tpu.memory_space<vmem>>, vector<128x128xf32>
    %c0_9 = arith.constant 0 : index
    %c0_10 = arith.constant 0 : index
    %11 = vector.load %arg7[%c0_9, %c0_10] : memref<8x128xf32, #tpu.memory_space<vmem>>, vector<8x128xf32>
    %12 = vector.extract_strided_slice %9 {offsets = [0, 0, 0], sizes = [1, 8, 128], strides = [1, 1, 1]} : vector<8x8x128xf32> to vector<1x8x128xf32>
    %13 = vector.shape_cast %12 : vector<1x8x128xf32> to vector<8x128xf32>
    %cst_11 = arith.constant dense<0.000000e+00> : vector<8x128xf32>
    %14 = tpu.matmul %11, %10, %cst_11 {dimension_numbers = #tpu.dot_dimension_numbers<[1], [0], [0], [1], [0, 0, 1, 1], [], []>} : vector<8x128xf32>, vector<128x128xf32>, vector<8x128xf32> -> vector<8x128xf32>
    %15 = arith.addf %13, %14 : vector<8x128xf32>
    %16 = math.tanh %15 : vector<8x128xf32>
    %17 = vector.extract_strided_slice %9 {offsets = [1, 0, 0], sizes = [1, 8, 128], strides = [1, 1, 1]} : vector<8x8x128xf32> to vector<1x8x128xf32>
    %18 = vector.shape_cast %17 : vector<1x8x128xf32> to vector<8x128xf32>
    %cst_12 = arith.constant dense<0.000000e+00> : vector<8x128xf32>
    %19 = tpu.matmul %16, %10, %cst_12 {dimension_numbers = #tpu.dot_dimension_numbers<[1], [0], [0], [1], [0, 0, 1, 1], [], []>} : vector<8x128xf32>, vector<128x128xf32>, vector<8x128xf32> -> vector<8x128xf32>
    %20 = arith.addf %18, %19 : vector<8x128xf32>
    %21 = math.tanh %20 : vector<8x128xf32>
    %22 = vector.extract_strided_slice %9 {offsets = [2, 0, 0], sizes = [1, 8, 128], strides = [1, 1, 1]} : vector<8x8x128xf32> to vector<1x8x128xf32>
    %23 = vector.shape_cast %22 : vector<1x8x128xf32> to vector<8x128xf32>
    %cst_13 = arith.constant dense<0.000000e+00> : vector<8x128xf32>
    %24 = tpu.matmul %21, %10, %cst_13 {dimension_numbers = #tpu.dot_dimension_numbers<[1], [0], [0], [1], [0, 0, 1, 1], [], []>} : vector<8x128xf32>, vector<128x128xf32>, vector<8x128xf32> -> vector<8x128xf32>
    %25 = arith.addf %23, %24 : vector<8x128xf32>
    %26 = math.tanh %25 : vector<8x128xf32>
    %27 = vector.extract_strided_slice %9 {offsets = [3, 0, 0], sizes = [1, 8, 128], strides = [1, 1, 1]} : vector<8x8x128xf32> to vector<1x8x128xf32>
    %28 = vector.shape_cast %27 : vector<1x8x128xf32> to vector<8x128xf32>
    %cst_14 = arith.constant dense<0.000000e+00> : vector<8x128xf32>
    %29 = tpu.matmul %26, %10, %cst_14 {dimension_numbers = #tpu.dot_dimension_numbers<[1], [0], [0], [1], [0, 0, 1, 1], [], []>} : vector<8x128xf32>, vector<128x128xf32>, vector<8x128xf32> -> vector<8x128xf32>
    %30 = arith.addf %28, %29 : vector<8x128xf32>
    %31 = math.tanh %30 : vector<8x128xf32>
    %32 = vector.extract_strided_slice %9 {offsets = [4, 0, 0], sizes = [1, 8, 128], strides = [1, 1, 1]} : vector<8x8x128xf32> to vector<1x8x128xf32>
    %33 = vector.shape_cast %32 : vector<1x8x128xf32> to vector<8x128xf32>
    %cst_15 = arith.constant dense<0.000000e+00> : vector<8x128xf32>
    %34 = tpu.matmul %31, %10, %cst_15 {dimension_numbers = #tpu.dot_dimension_numbers<[1], [0], [0], [1], [0, 0, 1, 1], [], []>} : vector<8x128xf32>, vector<128x128xf32>, vector<8x128xf32> -> vector<8x128xf32>
    %35 = arith.addf %33, %34 : vector<8x128xf32>
    %36 = math.tanh %35 : vector<8x128xf32>
    %37 = vector.extract_strided_slice %9 {offsets = [5, 0, 0], sizes = [1, 8, 128], strides = [1, 1, 1]} : vector<8x8x128xf32> to vector<1x8x128xf32>
    %38 = vector.shape_cast %37 : vector<1x8x128xf32> to vector<8x128xf32>
    %cst_16 = arith.constant dense<0.000000e+00> : vector<8x128xf32>
    %39 = tpu.matmul %36, %10, %cst_16 {dimension_numbers = #tpu.dot_dimension_numbers<[1], [0], [0], [1], [0, 0, 1, 1], [], []>} : vector<8x128xf32>, vector<128x128xf32>, vector<8x128xf32> -> vector<8x128xf32>
    %40 = arith.addf %38, %39 : vector<8x128xf32>
    %41 = math.tanh %40 : vector<8x128xf32>
    %42 = vector.extract_strided_slice %9 {offsets = [6, 0, 0], sizes = [1, 8, 128], strides = [1, 1, 1]} : vector<8x8x128xf32> to vector<1x8x128xf32>
    %43 = vector.shape_cast %42 : vector<1x8x128xf32> to vector<8x128xf32>
    %cst_17 = arith.constant dense<0.000000e+00> : vector<8x128xf32>
    %44 = tpu.matmul %41, %10, %cst_17 {dimension_numbers = #tpu.dot_dimension_numbers<[1], [0], [0], [1], [0, 0, 1, 1], [], []>} : vector<8x128xf32>, vector<128x128xf32>, vector<8x128xf32> -> vector<8x128xf32>
    %45 = arith.addf %43, %44 : vector<8x128xf32>
    %46 = math.tanh %45 : vector<8x128xf32>
    %47 = vector.extract_strided_slice %9 {offsets = [7, 0, 0], sizes = [1, 8, 128], strides = [1, 1, 1]} : vector<8x8x128xf32> to vector<1x8x128xf32>
    %48 = vector.shape_cast %47 : vector<1x8x128xf32> to vector<8x128xf32>
    %cst_18 = arith.constant dense<0.000000e+00> : vector<8x128xf32>
    %49 = tpu.matmul %46, %10, %cst_18 {dimension_numbers = #tpu.dot_dimension_numbers<[1], [0], [0], [1], [0, 0, 1, 1], [], []>} : vector<8x128xf32>, vector<128x128xf32>, vector<8x128xf32> -> vector<8x128xf32>
    %50 = arith.addf %48, %49 : vector<8x128xf32>
    %51 = math.tanh %50 : vector<8x128xf32>
    %c0_19 = arith.constant 0 : index
    %c0_20 = arith.constant 0 : index
    %52 = vector.load %arg7[%c0_19, %c0_20] : memref<8x128xf32, #tpu.memory_space<vmem>>, vector<8x128xf32>
    tpu.vector_store %arg7[%c0_19, %c0_20], %51 {strides = array<i32>} : memref<8x128xf32, #tpu.memory_space<vmem>>, vector<8x128xf32>,
    %c0_i32_21 = arith.constant 0 : i32
    %53 = arith.cmpi eq, %arg1, %c0_i32_21 : i32
    %54 = arith.extui %53 : i1 to i32
    %c0_i32_22 = arith.constant 0 : i32
    %55 = arith.cmpi ne, %54, %c0_i32_22 : i32
    scf.if %55 {
      %c0_23 = arith.constant 0 : index
      %c0_24 = arith.constant 0 : index
      %56 = vector.load %arg6[%c0_23, %c0_24] : memref<8x128xf32, #tpu.memory_space<vmem>>, vector<8x128xf32>
      tpu.vector_store %arg6[%c0_23, %c0_24], %51 {strides = array<i32>} : memref<8x128xf32, #tpu.memory_space<vmem>>, vector<8x128xf32>,
    } else {
    }
    return
  }
  func.func @transform_0(%arg0: i32, %arg1: i32) -> (i32, i32, i32) {
    %c0_i32 = arith.constant 0 : i32
    %c0_i32_0 = arith.constant 0 : i32
    return %arg1, %arg0, %c0_i32 : i32, i32, i32
  }
  func.func @transform_1(%arg0: i32, %arg1: i32) -> (i32, i32) {
    %c0_i32 = arith.constant 0 : i32
    %c0_i32_0 = arith.constant 0 : i32
    %c0_i32_1 = arith.constant 0 : i32
    return %c0_i32, %c0_i32_0 : i32, i32
  }
  func.func @transform_2(%arg0: i32, %arg1: i32) -> (i32, i32) {
    %c0_i32 = arith.constant 0 : i32
    %c0_i32_0 = arith.constant 0 : i32
    %c0_i32_1 = arith.constant 0 : i32
    return %c0_i32, %c0_i32_0 : i32, i32
  }
  func.func @transform_3(%arg0: i32, %arg1: i32) -> (i32, i32) {
    %c0_i32 = arith.constant 0 : i32
    %c0_i32_0 = arith.constant 0 : i32
    %c0_i32_1 = arith.constant 0 : i32
    return %c0_i32, %c0_i32_0 : i32, i32
  }
  func.func @transform_4(%arg0: i32, %arg1: i32) -> (i32, i32) {
    %c0_i32 = arith.constant 0 : i32
    %c0_i32_0 = arith.constant 0 : i32
    return %arg0, %c0_i32 : i32, i32
  }
}

module attributes {stable_mosaic.version = 11 : i64} {
  func.func @rnn_kernel(%arg0: i32, %arg1: i32, %arg2: memref<8x8x4xf32, #tpu.memory_space<vmem>>, %arg3: memref<4x128xf32, #tpu.memory_space<vmem>>, %arg4: memref<128x128xf32, #tpu.memory_space<vmem>>, %arg5: memref<1x128xf32, #tpu.memory_space<vmem>>, %arg6: memref<8x128xf32, #tpu.memory_space<vmem>>, %arg7: memref<8x128xf32, #tpu.memory_space<vmem>>) attributes {dimension_semantics = [#tpu.dimension_semantics<parallel>, #tpu.dimension_semantics<arbitrary>], iteration_bounds = array<i64: 1, 1>, scalar_prefetch = 0 : i64, scratch_operands = 1 : i64, tpu.core_type = #tpu.core_type<tc>, window_params = [{transform_indices = @transform_0, window_bounds = array<i64: 8, 8, 4>}, {pipeline_mode = #tpu.pipeline_mode<synchronous>, transform_indices = @transform_1, window_bounds = array<i64: 4, 128>}, {pipeline_mode = #tpu.pipeline_mode<synchronous>, transform_indices = @transform_2, window_bounds = array<i64: 128, 128>}, {pipeline_mode = #tpu.pipeline_mode<synchronous>, transform_indices = @transform_3, window_bounds = array<i64: 1, 128>}, {transform_indices = @transform_4, window_bounds = array<i64: 8, 128>}]} {
    %c0_i32 = arith.constant 0 : i32
    %0 = arith.cmpi eq, %arg1, %c0_i32 : i32
    %1 = arith.extui %0 : i1 to i32
    %c0_i32_0 = arith.constant 0 : i32
    %2 = arith.cmpi ne, %1, %c0_i32_0 : i32
    scf.if %2 {
      %cst_23 = arith.constant 0.000000e+00 : f32
      %56 = vector.broadcast %cst_23 : f32 to vector<8x128xf32>
      %c0_24 = arith.constant 0 : index
      %c0_25 = arith.constant 0 : index
      %57 = vector.load %arg7[%c0_24, %c0_25] : memref<8x128xf32, #tpu.memory_space<vmem>>, vector<8x128xf32>
      tpu.vector_store %arg7[%c0_24, %c0_25], %56 {strides = array<i32>} : memref<8x128xf32, #tpu.memory_space<vmem>>, vector<8x128xf32>,
    } else {
    }
    %c0 = arith.constant 0 : index
    %c0_1 = arith.constant 0 : index
    %c0_2 = arith.constant 0 : index
    %3 = vector.load %arg2[%c0, %c0_1, %c0_2] : memref<8x8x4xf32, #tpu.memory_space<vmem>>, vector<8x8x4xf32>
    %c0_3 = arith.constant 0 : index
    %c0_4 = arith.constant 0 : index
    %4 = vector.load %arg3[%c0_3, %c0_4] : memref<4x128xf32, #tpu.memory_space<vmem>>, vector<4x128xf32>
    %cst = arith.constant dense<0.000000e+00> : vector<8x8x128xf32>
    %5 = tpu.matmul %3, %4, %cst {dimension_numbers = #tpu.dot_dimension_numbers<[2], [0], [0, 1], [1], [0, 0, 0, 1, 1, 1], [], []>} : vector<8x8x4xf32>, vector<4x128xf32>, vector<8x8x128xf32> -> vector<8x8x128xf32>
    %c0_5 = arith.constant 0 : index
    %c0_6 = arith.constant 0 : index
    %6 = vector.load %arg5[%c0_5, %c0_6] : memref<1x128xf32, #tpu.memory_space<vmem>>, vector<1x128xf32>
    %7 = vector.shape_cast %6 : vector<1x128xf32> to vector<1x1x128xf32>
    %8 = vector.broadcast %7 : vector<1x1x128xf32> to vector<8x8x128xf32>
    %9 = arith.addf %5, %8 : vector<8x8x128xf32>
    %c0_7 = arith.constant 0 : index
    %c0_8 = arith.constant 0 : index
    %10 = vector.load %arg4[%c0_7, %c0_8] : memref<128x128xf32, #tpu.memory_space<vmem>>, vector<128x128xf32>
    %c0_9 = arith.constant 0 : index
    %c0_10 = arith.constant 0 : index
    %11 = vector.load %arg7[%c0_9, %c0_10] : memref<8x128xf32, #tpu.memory_space<vmem>>, vector<8x128xf32>
    %12 = vector.extract_strided_slice %9 {offsets = [0, 0, 0], sizes = [1, 8, 128], strides = [1, 1, 1]} : vector<8x8x128xf32> to vector<1x8x128xf32>
    %13 = vector.shape_cast %12 : vector<1x8x128xf32> to vector<8x128xf32>
    %cst_11 = arith.constant dense<0.000000e+00> : vector<8x128xf32>
    %14 = tpu.matmul %11, %10, %cst_11 {dimension_numbers = #tpu.dot_dimension_numbers<[1], [0], [0], [1], [0, 0, 1, 1], [], []>} : vector<8x128xf32>, vector<128x128xf32>, vector<8x128xf32> -> vector<8x128xf32>
    %15 = arith.addf %13, %14 : vector<8x128xf32>
    %16 = math.tanh %15 : vector<8x128xf32>
    %17 = vector.extract_strided_slice %9 {offsets = [1, 0, 0], sizes = [1, 8, 128], strides = [1, 1, 1]} : vector<8x8x128xf32> to vector<1x8x128xf32>
    %18 = vector.shape_cast %17 : vector<1x8x128xf32> to vector<8x128xf32>
    %cst_12 = arith.constant dense<0.000000e+00> : vector<8x128xf32>
    %19 = tpu.matmul %16, %10, %cst_12 {dimension_numbers = #tpu.dot_dimension_numbers<[1], [0], [0], [1], [0, 0, 1, 1], [], []>} : vector<8x128xf32>, vector<128x128xf32>, vector<8x128xf32> -> vector<8x128xf32>
    %20 = arith.addf %18, %19 : vector<8x128xf32>
    %21 = math.tanh %20 : vector<8x128xf32>
    %22 = vector.extract_strided_slice %9 {offsets = [2, 0, 0], sizes = [1, 8, 128], strides = [1, 1, 1]} : vector<8x8x128xf32> to vector<1x8x128xf32>
    %23 = vector.shape_cast %22 : vector<1x8x128xf32> to vector<8x128xf32>
    %cst_13 = arith.constant dense<0.000000e+00> : vector<8x128xf32>
    %24 = tpu.matmul %21, %10, %cst_13 {dimension_numbers = #tpu.dot_dimension_numbers<[1], [0], [0], [1], [0, 0, 1, 1], [], []>} : vector<8x128xf32>, vector<128x128xf32>, vector<8x128xf32> -> vector<8x128xf32>
    %25 = arith.addf %23, %24 : vector<8x128xf32>
    %26 = math.tanh %25 : vector<8x128xf32>
    %27 = vector.extract_strided_slice %9 {offsets = [3, 0, 0], sizes = [1, 8, 128], strides = [1, 1, 1]} : vector<8x8x128xf32> to vector<1x8x128xf32>
    %28 = vector.shape_cast %27 : vector<1x8x128xf32> to vector<8x128xf32>
    %cst_14 = arith.constant dense<0.000000e+00> : vector<8x128xf32>
    %29 = tpu.matmul %26, %10, %cst_14 {dimension_numbers = #tpu.dot_dimension_numbers<[1], [0], [0], [1], [0, 0, 1, 1], [], []>} : vector<8x128xf32>, vector<128x128xf32>, vector<8x128xf32> -> vector<8x128xf32>
    %30 = arith.addf %28, %29 : vector<8x128xf32>
    %31 = math.tanh %30 : vector<8x128xf32>
    %32 = vector.extract_strided_slice %9 {offsets = [4, 0, 0], sizes = [1, 8, 128], strides = [1, 1, 1]} : vector<8x8x128xf32> to vector<1x8x128xf32>
    %33 = vector.shape_cast %32 : vector<1x8x128xf32> to vector<8x128xf32>
    %cst_15 = arith.constant dense<0.000000e+00> : vector<8x128xf32>
    %34 = tpu.matmul %31, %10, %cst_15 {dimension_numbers = #tpu.dot_dimension_numbers<[1], [0], [0], [1], [0, 0, 1, 1], [], []>} : vector<8x128xf32>, vector<128x128xf32>, vector<8x128xf32> -> vector<8x128xf32>
    %35 = arith.addf %33, %34 : vector<8x128xf32>
    %36 = math.tanh %35 : vector<8x128xf32>
    %37 = vector.extract_strided_slice %9 {offsets = [5, 0, 0], sizes = [1, 8, 128], strides = [1, 1, 1]} : vector<8x8x128xf32> to vector<1x8x128xf32>
    %38 = vector.shape_cast %37 : vector<1x8x128xf32> to vector<8x128xf32>
    %cst_16 = arith.constant dense<0.000000e+00> : vector<8x128xf32>
    %39 = tpu.matmul %36, %10, %cst_16 {dimension_numbers = #tpu.dot_dimension_numbers<[1], [0], [0], [1], [0, 0, 1, 1], [], []>} : vector<8x128xf32>, vector<128x128xf32>, vector<8x128xf32> -> vector<8x128xf32>
    %40 = arith.addf %38, %39 : vector<8x128xf32>
    %41 = math.tanh %40 : vector<8x128xf32>
    %42 = vector.extract_strided_slice %9 {offsets = [6, 0, 0], sizes = [1, 8, 128], strides = [1, 1, 1]} : vector<8x8x128xf32> to vector<1x8x128xf32>
    %43 = vector.shape_cast %42 : vector<1x8x128xf32> to vector<8x128xf32>
    %cst_17 = arith.constant dense<0.000000e+00> : vector<8x128xf32>
    %44 = tpu.matmul %41, %10, %cst_17 {dimension_numbers = #tpu.dot_dimension_numbers<[1], [0], [0], [1], [0, 0, 1, 1], [], []>} : vector<8x128xf32>, vector<128x128xf32>, vector<8x128xf32> -> vector<8x128xf32>
    %45 = arith.addf %43, %44 : vector<8x128xf32>
    %46 = math.tanh %45 : vector<8x128xf32>
    %47 = vector.extract_strided_slice %9 {offsets = [7, 0, 0], sizes = [1, 8, 128], strides = [1, 1, 1]} : vector<8x8x128xf32> to vector<1x8x128xf32>
    %48 = vector.shape_cast %47 : vector<1x8x128xf32> to vector<8x128xf32>
    %cst_18 = arith.constant dense<0.000000e+00> : vector<8x128xf32>
    %49 = tpu.matmul %46, %10, %cst_18 {dimension_numbers = #tpu.dot_dimension_numbers<[1], [0], [0], [1], [0, 0, 1, 1], [], []>} : vector<8x128xf32>, vector<128x128xf32>, vector<8x128xf32> -> vector<8x128xf32>
    %50 = arith.addf %48, %49 : vector<8x128xf32>
    %51 = math.tanh %50 : vector<8x128xf32>
    %c0_19 = arith.constant 0 : index
    %c0_20 = arith.constant 0 : index
    %52 = vector.load %arg7[%c0_19, %c0_20] : memref<8x128xf32, #tpu.memory_space<vmem>>, vector<8x128xf32>
    tpu.vector_store %arg7[%c0_19, %c0_20], %51 {strides = array<i32>} : memref<8x128xf32, #tpu.memory_space<vmem>>, vector<8x128xf32>,
    %c0_i32_21 = arith.constant 0 : i32
    %53 = arith.cmpi eq, %arg1, %c0_i32_21 : i32
    %54 = arith.extui %53 : i1 to i32
    %c0_i32_22 = arith.constant 0 : i32
    %55 = arith.cmpi ne, %54, %c0_i32_22 : i32
    scf.if %55 {
      %c0_23 = arith.constant 0 : index
      %c0_24 = arith.constant 0 : index
      %56 = vector.load %arg6[%c0_23, %c0_24] : memref<8x128xf32, #tpu.memory_space<vmem>>, vector<8x128xf32>
      tpu.vector_store %arg6[%c0_23, %c0_24], %51 {strides = array<i32>} : memref<8x128xf32, #tpu.memory_space<vmem>>, vector<8x128xf32>,
    } else {
    }
    return
  }
  func.func @transform_0(%arg0: i32, %arg1: i32) -> (i32, i32, i32) {
    %c0_i32 = arith.constant 0 : i32
    %c0_i32_0 = arith.constant 0 : i32
    return %arg1, %arg0, %c0_i32 : i32, i32, i32
  }
  func.func @transform_1(%arg0: i32, %arg1: i32) -> (i32, i32) {
    %c0_i32 = arith.constant 0 : i32
    %c0_i32_0 = arith.constant 0 : i32
    %c0_i32_1 = arith.constant 0 : i32
    return %c0_i32, %c0_i32_0 : i32, i32
  }
  func.func @transform_2(%arg0: i32, %arg1: i32) -> (i32, i32) {
    %c0_i32 = arith.constant 0 : i32
    %c0_i32_0 = arith.constant 0 : i32
    %c0_i32_1 = arith.constant 0 : i32
    return %c0_i32, %c0_i32_0 : i32, i32
  }
  func.func @transform_3(%arg0: i32, %arg1: i32) -> (i32, i32) {
    %c0_i32 = arith.constant 0 : i32
    %c0_i32_0 = arith.constant 0 : i32
    %c0_i32_1 = arith.constant 0 : i32
    return %c0_i32, %c0_i32_0 : i32, i32
  }
  func.func @transform_4(%arg0: i32, %arg1: i32) -> (i32, i32) {
    %c0_i32 = arith.constant 0 : i32
    %c0_i32_0 = arith.constant 0 : i32
    return %arg0, %c0_i32 : i32, i32
  }
}

</mosaic_0001>

<llo_original>
// kernel: tpu_custom_call.1
$region0: #{tpu_custom_call.1}
  #allocation0 [shape = 'u32[]', space=smem, size = 0x4, offset = 0x4, fixed_abs, tag = 'smem constant byte address 0x4 - core index']
  #allocation1 [shape = 'u32[144,128]{1,0:T(1,128)}', space=vmem, size = 0x12000, scoped, tag = 'internal scratch']
  #allocation2 [shape = 'f32[8,128]{1,0:T(8,128)}', space=vmem, size = 0x1000, scoped, tag = 'scratch operand']
  %s0 = inlined_call_operand.vmem [shape: f32[8,8,4], index: 0, kind: input, shape index: {}]
  %s1 = inlined_call_operand.vmem [shape: f32[4,128], index: 1, kind: input, shape index: {}]
  %s2 = inlined_call_operand.hbm [shape: f32[128,128], index: 2, kind: input, shape index: {}]
  %s3 = inlined_call_operand.vmem [shape: f32[1,128], index: 3, kind: input, shape index: {}]
  %s4 = inlined_call_operand.hbm [shape: f32[8,128], index: 4, kind: output, shape index: {}]
  %s5 = sld [smem:[#allocation0]]
  $region38: #{tpu_custom_call.1} parent=0
    _
  %s7 = ssub.s32 1, %s5
  %s8 = scalar_select 0, %s7, %s5
  $region1: #{tpu_custom_call.1} parent=0
    #allocation3 [shape = 'u8[65536]{0}', space=vmem, size = 0x10000, scoped, tag = 'input window, operand 2, single buffered']
    #allocation4 [shape = 's32[1]{0}', space=sflag, size = 0x4, scoped, tag = 'scoped memory for tpu_custom_call.1']
    #allocation5 [shape = 's32[1]{0}', space=sflag, size = 0x4, scoped, tag = 'scoped memory for tpu_custom_call.1']
    #allocation6 [shape = 'u8[4096]{0}', space=vmem, size = 0x1000, scoped, tag = 'output window, operand 0, single buffered']
    %9 = vsyncpa [#allocation4], 0
    %10 = vsyncpa [#allocation5], 0
    // Predicated region
    $region2: #{tpu_custom_call.1} parent=1 // pred_check
      _
    $region3: #{tpu_custom_call.1} parent=1 // pred_check_branch
      %12 = sbr.rel (0) target = $region5
    $region4: #{tpu_custom_call.1} parent=1 // pred_region
      _
    $region5: #{tpu_custom_call.1} parent=1 // pred_fallthru
      _
    // Predicated region
    $region6: #{tpu_custom_call.1} parent=1 // pred_check
      _
    $region7: #{tpu_custom_call.1} parent=1 // pred_check_branch
      %14 = sbr.rel (0) target = $region9
    $region8: #{tpu_custom_call.1} parent=1 // pred_region
      _
    $region9: #{tpu_custom_call.1} parent=1 // pred_fallthru
      _
    // Predicated region
    $region10: #{tpu_custom_call.1} parent=1 // pred_check
      _
    $region11: #{tpu_custom_call.1} parent=1 // pred_check_branch
      %16 = sbr.rel (0) target = $region13
    $region12: #{tpu_custom_call.1} parent=1 // pred_region
      %s18 = ssub.s32 2048, 2048
      %19 = vsyncadd [#allocation4], %s18
      %s20 = sshll.u32 [#allocation3], 4
      %s21 = int_to_ptr.vmem [resolvable:$true] %s20
      %26 = dma.hbm_to_vmem [thread:$0]  %s2, 2048, %s21, [#allocation4], 128, 128, 8
    $region13: #{tpu_custom_call.1} parent=1 // pred_fallthru
      _
    // Predicated region
    $region14: #{tpu_custom_call.1} parent=1 // pred_check
      _
    $region15: #{tpu_custom_call.1} parent=1 // pred_check_branch
      %28 = sbr.rel (0) target = $region17
    $region16: #{tpu_custom_call.1} parent=1 // pred_region
      _
    $region17: #{tpu_custom_call.1} parent=1 // pred_fallthru
      _
    // Predicated region
    $region18: #{tpu_custom_call.1} parent=1 // pred_check
      _
    $region19: #{tpu_custom_call.1} parent=1 // pred_check_branch
      %30 = sbr.rel (0) target = $region21
    $region20: #{tpu_custom_call.1} parent=1 // pred_region
      %31 = dma.done [#allocation4], 2048
    $region21: #{tpu_custom_call.1} parent=1 // pred_fallthru
      _
    %p32 = scmp.eq.s32.totalorder 0, 0
    // Predicated region
    $region22: #{tpu_custom_call.1} parent=1 // pred_check
      %p33 = pneg %p32
    $region23: #{tpu_custom_call.1} parent=1 // pred_check_branch
      %35 = sbr.rel (%p33) target = $region25
    $region24: #{tpu_custom_call.1} parent=1 // pred_region
      %36 = vst [vmem:[#allocation2] sm:$0xff] 0.0
    $region25: #{tpu_custom_call.1} parent=1 // pred_fallthru
      _
    %v37 = vld [vmem:[%s0] sm:$0xff]
    %v38 = vld [vmem:[%s0 + $0x8] sm:$0xff]
    %v39 = vld [vmem:[%s0 + $0x10] sm:$0xff]
    %v40 = vld [vmem:[%s0 + $0x18] sm:$0xff]
    %v41 = vld [vmem:[%s0 + $0x20] sm:$0xff]
    %v42 = vld [vmem:[%s0 + $0x28] sm:$0xff]
    %v43 = vld [vmem:[%s0 + $0x30] sm:$0xff]
    %v44 = vld [vmem:[%s0 + $0x38] sm:$0xff]
    %v45 = vld [vmem:[%s1] sm:$0xf]
    %v46 = vld [vmem:[%s3] sm:$0x1]
    %v48 = vlaneseq
    %v49 = vshrl.u32 %v48, 7
    %v50 = vsub.s32 0, %v49
    %v51 = vrot.slane %v46, %v50
    %vm53 = vcmask 31744
    %v55 = vsel %vm53, %v37, 0
    %v58 = vsel %vm53, %v38, 0
    %v61 = vsel %vm53, %v39, 0
    %v64 = vsel %vm53, %v40, 0
    %v67 = vsel %vm53, %v41, 0
    %v70 = vsel %vm53, %v42, 0
    %v73 = vsel %vm53, %v43, 0
    %v76 = vsel %vm53, %v44, 0
    %vm78 = vcmask 1043456
    %v80 = vsel %vm78, %v45, 0
    %82 = vmatprep.subr.mxu0 0.0
    %83 = vmatpush1.msra.mxu0 0.0
    %84 = vmatprep.subr.mxu0 0.0
    %85 = vmatpush1.msra.mxu0 0.0
    %86 = vmatprep.subr.mxu0 0.0
    %87 = vmatpush1.msra.mxu0 0.0
    %88 = vmatprep.subr.mxu0 0.0
    %89 = vmatpush1.msra.mxu0 0.0
    %90 = vmatprep.subr.mxu0 0.0
    %91 = vmatpush1.msra.mxu0 0.0
    %92 = vmatprep.subr.mxu0 0.0
    %93 = vmatpush1.msra.mxu0 0.0
    %94 = vmatprep.subr.mxu0 0.0
    %95 = vmatpush1.msra.mxu0 0.0
    %96 = vmatprep.subr.mxu0 0.0
    %97 = vmatpush1.msra.mxu0 0.0
    %98 = vmatprep.subr.mxu0 0.0
    %99 = vmatpush1.msra.mxu0 0.0
    %100 = vmatprep.subr.mxu0 0.0
    %101 = vmatpush1.msra.mxu0 0.0
    %102 = vmatprep.subr.mxu0 0.0
    %103 = vmatpush1.msra.mxu0 0.0
    %104 = vmatprep.subr.mxu0 0.0
    %105 = vmatpush1.msra.mxu0 0.0
    %106 = vmatprep.subr.mxu0 0.0
    %107 = vmatpush1.msra.mxu0 0.0
    %108 = vmatprep.subr.mxu0 0.0
    %109 = vmatpush1.msra.mxu0 0.0
    %110 = vmatprep.subr.mxu0 0.0
    %111 = vmatpush1.msra.mxu0 0.0
    %112 = vmatprep.subr.mxu0 0.0
    %113 = vmatpush1.msra.mxu0 %v80
    %114 = vmatprep.subr.mxu0 0.0
    %115 = vmatpush2.msra.mxu0 0.0
    %116 = vmatprep.subr.mxu0 0.0
    %117 = vmatpush2.msra.mxu0 0.0
    %118 = vmatprep.subr.mxu0 0.0
    %119 = vmatpush2.msra.mxu0 0.0
    %120 = vmatprep.subr.mxu0 0.0
    %121 = vmatpush2.msra.mxu0 0.0
    %122 = vmatprep.subr.mxu0 0.0
    %123 = vmatpush2.msra.mxu0 0.0
    %124 = vmatprep.subr.mxu0 0.0
    %125 = vmatpush2.msra.mxu0 0.0
    %126 = vmatprep.subr.mxu0 0.0
    %127 = vmatpush2.msra.mxu0 0.0
    %128 = vmatprep.subr.mxu0 0.0
    %129 = vmatpush2.msra.mxu0 0.0
    %130 = vmatprep.subr.mxu0 0.0
    %131 = vmatpush2.msra.mxu0 0.0
    %132 = vmatprep.subr.mxu0 0.0
    %133 = vmatpush2.msra.mxu0 0.0
    %134 = vmatprep.subr.mxu0 0.0
    %135 = vmatpush2.msra.mxu0 0.0
    %136 = vmatprep.subr.mxu0 0.0
    %137 = vmatpush2.msra.mxu0 0.0
    %138 = vmatprep.subr.mxu0 0.0
    %139 = vmatpush2.msra.mxu0 0.0
    %140 = vmatprep.subr.mxu0 0.0
    %141 = vmatpush2.msra.mxu0 0.0
    %142 = vmatprep.subr.mxu0 0.0
    %143 = vmatpush2.msra.mxu0 0.0
    %144 = vmatprep.subr.mxu0 0.0
    %145 = vmatpush2.msra.mxu0 0.0
    %146 = vmatprep.mubr.f32.mxu0 0.0
    %147 = vmatmul.mubr.f32.gmra.mxu0 %v55
    %v148 = vpop.f32.mrf.mxu0
    %v149 = vadd.f32 %v51, %v148
    %v150 = vpop.f32.mrf.mxu0
    %151 = vmatprep.mubr.f32.mxu0 0.0
    %152 = vmatmul.mubr.f32.gmra.mxu0 %v58
    %v153 = vpop.f32.mrf.mxu0
    %v154 = vadd.f32 %v51, %v153
    %v155 = vpop.f32.mrf.mxu0
    %156 = vmatprep.mubr.f32.mxu0 0.0
    %157 = vmatmul.mubr.f32.gmra.mxu0 %v61
    %v158 = vpop.f32.mrf.mxu0
    %v159 = vadd.f32 %v51, %v158
    %v160 = vpop.f32.mrf.mxu0
    %161 = vmatprep.mubr.f32.mxu0 0.0
    %162 = vmatmul.mubr.f32.gmra.mxu0 %v64
    %v163 = vpop.f32.mrf.mxu0
    %v164 = vadd.f32 %v51, %v163
    %v165 = vpop.f32.mrf.mxu0
    %166 = vmatprep.mubr.f32.mxu0 0.0
    %167 = vmatmul.mubr.f32.gmra.mxu0 %v67
    %v168 = vpop.f32.mrf.mxu0
    %v169 = vadd.f32 %v51, %v168
    %v170 = vpop.f32.mrf.mxu0
    %171 = vmatprep.mubr.f32.mxu0 0.0
    %172 = vmatmul.mubr.f32.gmra.mxu0 %v70
    %v173 = vpop.f32.mrf.mxu0
    %v174 = vadd.f32 %v51, %v173
    %v175 = vpop.f32.mrf.mxu0
    %176 = vmatprep.mubr.f32.mxu0 0.0
    %177 = vmatmul.mubr.f32.gmra.mxu0 %v73
    %v178 = vpop.f32.mrf.mxu0
    %v179 = vadd.f32 %v51, %v178
    %v180 = vpop.f32.mrf.mxu0
    %181 = vmatprep.mubr.f32.mxu0 0.0
    %182 = vmatmul.mubr.f32.gmra.mxu0 %v76
    %v183 = vpop.f32.mrf.mxu0
    %v184 = vadd.f32 %v51, %v183
    %v185 = vpop.f32.mrf.mxu0
    %186 = vdwg.mxu0
    %v187 = vld [vmem:[#allocation3] sm:$0xff]
    %v188 = vld [vmem:[#allocation3 + $0x8] sm:$0xff]
    %v189 = vld [vmem:[#allocation3 + $0x10] sm:$0xff]
    %v190 = vld [vmem:[#allocation3 + $0x18] sm:$0xff]
    %v191 = vld [vmem:[#allocation3 + $0x20] sm:$0xff]
    %v192 = vld [vmem:[#allocation3 + $0x28] sm:$0xff]
    %v193 = vld [vmem:[#allocation3 + $0x30] sm:$0xff]
    %v194 = vld [vmem:[#allocation3 + $0x38] sm:$0xff]
    %v195 = vld [vmem:[#allocation3 + $0x40] sm:$0xff]
    %v196 = vld [vmem:[#allocation3 + $0x48] sm:$0xff]
    %v197 = vld [vmem:[#allocation3 + $0x50] sm:$0xff]
    %v198 = vld [vmem:[#allocation3 + $0x58] sm:$0xff]
    %v199 = vld [vmem:[#allocation3 + $0x60] sm:$0xff]
    %v200 = vld [vmem:[#allocation3 + $0x68] sm:$0xff]
    %v201 = vld [vmem:[#allocation3 + $0x70] sm:$0xff]
    %v202 = vld [vmem:[#allocation3 + $0x78] sm:$0xff]
    %v203 = vld [vmem:[#allocation2] sm:$0xff]
    %204 = vmatprep.subr.mxu0 0.0
    %205 = vmatpush1.msra.mxu0 %v202
    %206 = vmatprep.subr.mxu0 0.0
    %207 = vmatpush1.msra.mxu0 %v201
    %208 = vmatprep.subr.mxu0 0.0
    %209 = vmatpush1.msra.mxu0 %v200
    %210 = vmatprep.subr.mxu0 0.0
    %211 = vmatpush1.msra.mxu0 %v199
    %212 = vmatprep.subr.mxu0 0.0
    %213 = vmatpush1.msra.mxu0 %v198
    %214 = vmatprep.subr.mxu0 0.0
    %215 = vmatpush1.msra.mxu0 %v197
    %216 = vmatprep.subr.mxu0 0.0
    %217 = vmatpush1.msra.mxu0 %v196
    %218 = vmatprep.subr.mxu0 0.0
    %219 = vmatpush1.msra.mxu0 %v195
    %220 = vmatprep.subr.mxu0 0.0
    %221 = vmatpush1.msra.mxu0 %v194
    %222 = vmatprep.subr.mxu0 0.0
    %223 = vmatpush1.msra.mxu0 %v193
    %224 = vmatprep.subr.mxu0 0.0
    %225 = vmatpush1.msra.mxu0 %v192
    %226 = vmatprep.subr.mxu0 0.0
    %227 = vmatpush1.msra.mxu0 %v191
    %228 = vmatprep.subr.mxu0 0.0
    %229 = vmatpush1.msra.mxu0 %v190
    %230 = vmatprep.subr.mxu0 0.0
    %231 = vmatpush1.msra.mxu0 %v189
    %232 = vmatprep.subr.mxu0 0.0
    %233 = vmatpush1.msra.mxu0 %v188
    %234 = vmatprep.subr.mxu0 0.0
    %235 = vmatpush1.msra.mxu0 %v187
    %236 = vmatprep.subr.mxu0 0.0
    %237 = vmatpush2.msra.mxu0 0.0
    %238 = vmatprep.subr.mxu0 0.0
    %239 = vmatpush2.msra.mxu0 0.0
    %240 = vmatprep.subr.mxu0 0.0
    %241 = vmatpush2.msra.mxu0 0.0
    %242 = vmatprep.subr.mxu0 0.0
    %243 = vmatpush2.msra.mxu0 0.0
    %244 = vmatprep.subr.mxu0 0.0
    %245 = vmatpush2.msra.mxu0 0.0
    %246 = vmatprep.subr.mxu0 0.0
    %247 = vmatpush2.msra.mxu0 0.0
    %248 = vmatprep.subr.mxu0 0.0
    %249 = vmatpush2.msra.mxu0 0.0
    %250 = vmatprep.subr.mxu0 0.0
    %251 = vmatpush2.msra.mxu0 0.0
    %252 = vmatprep.subr.mxu0 0.0
    %253 = vmatpush2.msra.mxu0 0.0
    %254 = vmatprep.subr.mxu0 0.0
    %255 = vmatpush2.msra.mxu0 0.0
    %256 = vmatprep.subr.mxu0 0.0
    %257 = vmatpush2.msra.mxu0 0.0
    %258 = vmatprep.subr.mxu0 0.0
    %259 = vmatpush2.msra.mxu0 0.0
    %260 = vmatprep.subr.mxu0 0.0
    %261 = vmatpush2.msra.mxu0 0.0
    %262 = vmatprep.subr.mxu0 0.0
    %263 = vmatpush2.msra.mxu0 0.0
    %264 = vmatprep.subr.mxu0 0.0
    %265 = vmatpush2.msra.mxu0 0.0
    %266 = vmatprep.subr.mxu0 0.0
    %267 = vmatpush2.msra.mxu0 0.0
    %268 = vmatprep.mubr.f32.mxu0 0.0
    %269 = vmatmul.mubr.f32.gmra.mxu0 %v203
    %v270 = vpop.f32.mrf.mxu0
    %v271 = vadd.f32 0.0, %v270
    %v272 = vpop.f32.mrf.mxu0
    %273 = vdwg.mxu0
    %v274 = vadd.f32 %v149, %v271
    %v275 = vtanh.pop %v274
    %276 = vmatprep.subr.mxu0 0.0
    %277 = vmatpush1.msra.mxu0 %v202
    %278 = vmatprep.subr.mxu0 0.0
    %279 = vmatpush1.msra.mxu0 %v201
    %280 = vmatprep.subr.mxu0 0.0
    %281 = vmatpush1.msra.mxu0 %v200
    %282 = vmatprep.subr.mxu0 0.0
    %283 = vmatpush1.msra.mxu0 %v199
    %284 = vmatprep.subr.mxu0 0.0
    %285 = vmatpush1.msra.mxu0 %v198
    %286 = vmatprep.subr.mxu0 0.0
    %287 = vmatpush1.msra.mxu0 %v197
    %288 = vmatprep.subr.mxu0 0.0
    %289 = vmatpush1.msra.mxu0 %v196
    %290 = vmatprep.subr.mxu0 0.0
    %291 = vmatpush1.msra.mxu0 %v195
    %292 = vmatprep.subr.mxu0 0.0
    %293 = vmatpush1.msra.mxu0 %v194
    %294 = vmatprep.subr.mxu0 0.0
    %295 = vmatpush1.msra.mxu0 %v193
    %296 = vmatprep.subr.mxu0 0.0
    %297 = vmatpush1.msra.mxu0 %v192
    %298 = vmatprep.subr.mxu0 0.0
    %299 = vmatpush1.msra.mxu0 %v191
    %300 = vmatprep.subr.mxu0 0.0
    %301 = vmatpush1.msra.mxu0 %v190
    %302 = vmatprep.subr.mxu0 0.0
    %303 = vmatpush1.msra.mxu0 %v189
    %304 = vmatprep.subr.mxu0 0.0
    %305 = vmatpush1.msra.mxu0 %v188
    %306 = vmatprep.subr.mxu0 0.0
    %307 = vmatpush1.msra.mxu0 %v187
    %308 = vmatprep.subr.mxu0 0.0
    %309 = vmatpush2.msra.mxu0 0.0
    %310 = vmatprep.subr.mxu0 0.0
    %311 = vmatpush2.msra.mxu0 0.0
    %312 = vmatprep.subr.mxu0 0.0
    %313 = vmatpush2.msra.mxu0 0.0
    %314 = vmatprep.subr.mxu0 0.0
    %315 = vmatpush2.msra.mxu0 0.0
    %316 = vmatprep.subr.mxu0 0.0
    %317 = vmatpush2.msra.mxu0 0.0
    %318 = vmatprep.subr.mxu0 0.0
    %319 = vmatpush2.msra.mxu0 0.0
    %320 = vmatprep.subr.mxu0 0.0
    %321 = vmatpush2.msra.mxu0 0.0
    %322 = vmatprep.subr.mxu0 0.0
    %323 = vmatpush2.msra.mxu0 0.0
    %324 = vmatprep.subr.mxu0 0.0
    %325 = vmatpush2.msra.mxu0 0.0
    %326 = vmatprep.subr.mxu0 0.0
    %327 = vmatpush2.msra.mxu0 0.0
    %328 = vmatprep.subr.mxu0 0.0
    %329 = vmatpush2.msra.mxu0 0.0
    %330 = vmatprep.subr.mxu0 0.0
    %331 = vmatpush2.msra.mxu0 0.0
    %332 = vmatprep.subr.mxu0 0.0
    %333 = vmatpush2.msra.mxu0 0.0
    %334 = vmatprep.subr.mxu0 0.0
    %335 = vmatpush2.msra.mxu0 0.0
    %336 = vmatprep.subr.mxu0 0.0
    %337 = vmatpush2.msra.mxu0 0.0
    %338 = vmatprep.subr.mxu0 0.0
    %339 = vmatpush2.msra.mxu0 0.0
    %340 = vmatprep.mubr.f32.mxu0 0.0
    %341 = vmatmul.mubr.f32.gmra.mxu0 %v275
    %v342 = vpop.f32.mrf.mxu0
    %v343 = vadd.f32 0.0, %v342
    %v344 = vpop.f32.mrf.mxu0
    %345 = vdwg.mxu0
    %v346 = vadd.f32 %v154, %v343
    %v347 = vtanh.pop %v346
    %348 = vmatprep.subr.mxu0 0.0
    %349 = vmatpush1.msra.mxu0 %v202
    %350 = vmatprep.subr.mxu0 0.0
    %351 = vmatpush1.msra.mxu0 %v201
    %352 = vmatprep.subr.mxu0 0.0
    %353 = vmatpush1.msra.mxu0 %v200
    %354 = vmatprep.subr.mxu0 0.0
    %355 = vmatpush1.msra.mxu0 %v199
    %356 = vmatprep.subr.mxu0 0.0
    %357 = vmatpush1.msra.mxu0 %v198
    %358 = vmatprep.subr.mxu0 0.0
    %359 = vmatpush1.msra.mxu0 %v197
    %360 = vmatprep.subr.mxu0 0.0
    %361 = vmatpush1.msra.mxu0 %v196
    %362 = vmatprep.subr.mxu0 0.0
    %363 = vmatpush1.msra.mxu0 %v195
    %364 = vmatprep.subr.mxu0 0.0
    %365 = vmatpush1.msra.mxu0 %v194
    %366 = vmatprep.subr.mxu0 0.0
    %367 = vmatpush1.msra.mxu0 %v193
    %368 = vmatprep.subr.mxu0 0.0
    %369 = vmatpush1.msra.mxu0 %v192
    %370 = vmatprep.subr.mxu0 0.0
    %371 = vmatpush1.msra.mxu0 %v191
    %372 = vmatprep.subr.mxu0 0.0
    %373 = vmatpush1.msra.mxu0 %v190
    %374 = vmatprep.subr.mxu0 0.0
    %375 = vmatpush1.msra.mxu0 %v189
    %376 = vmatprep.subr.mxu0 0.0
    %377 = vmatpush1.msra.mxu0 %v188
    %378 = vmatprep.subr.mxu0 0.0
    %379 = vmatpush1.msra.mxu0 %v187
    %380 = vmatprep.subr.mxu0 0.0
    %381 = vmatpush2.msra.mxu0 0.0
    %382 = vmatprep.subr.mxu0 0.0
    %383 = vmatpush2.msra.mxu0 0.0
    %384 = vmatprep.subr.mxu0 0.0
    %385 = vmatpush2.msra.mxu0 0.0
    %386 = vmatprep.subr.mxu0 0.0
    %387 = vmatpush2.msra.mxu0 0.0
    %388 = vmatprep.subr.mxu0 0.0
    %389 = vmatpush2.msra.mxu0 0.0
    %390 = vmatprep.subr.mxu0 0.0
    %391 = vmatpush2.msra.mxu0 0.0
    %392 = vmatprep.subr.mxu0 0.0
    %393 = vmatpush2.msra.mxu0 0.0
    %394 = vmatprep.subr.mxu0 0.0
    %395 = vmatpush2.msra.mxu0 0.0
    %396 = vmatprep.subr.mxu0 0.0
    %397 = vmatpush2.msra.mxu0 0.0
    %398 = vmatprep.subr.mxu0 0.0
    %399 = vmatpush2.msra.mxu0 0.0
    %400 = vmatprep.subr.mxu0 0.0
    %401 = vmatpush2.msra.mxu0 0.0
    %402 = vmatprep.subr.mxu0 0.0
    %403 = vmatpush2.msra.mxu0 0.0
    %404 = vmatprep.subr.mxu0 0.0
    %405 = vmatpush2.msra.mxu0 0.0
    %406 = vmatprep.subr.mxu0 0.0
    %407 = vmatpush2.msra.mxu0 0.0
    %408 = vmatprep.subr.mxu0 0.0
    %409 = vmatpush2.msra.mxu0 0.0
    %410 = vmatprep.subr.mxu0 0.0
    %411 = vmatpush2.msra.mxu0 0.0
    %412 = vmatprep.mubr.f32.mxu0 0.0
    %413 = vmatmul.mubr.f32.gmra.mxu0 %v347
    %v414 = vpop.f32.mrf.mxu0
    %v415 = vadd.f32 0.0, %v414
    %v416 = vpop.f32.mrf.mxu0
    %417 = vdwg.mxu0
    %v418 = vadd.f32 %v159, %v415
    %v419 = vtanh.pop %v418
    %420 = vmatprep.subr.mxu0 0.0
    %421 = vmatpush1.msra.mxu0 %v202
    %422 = vmatprep.subr.mxu0 0.0
    %423 = vmatpush1.msra.mxu0 %v201
    %424 = vmatprep.subr.mxu0 0.0
    %425 = vmatpush1.msra.mxu0 %v200
    %426 = vmatprep.subr.mxu0 0.0
    %427 = vmatpush1.msra.mxu0 %v199
    %428 = vmatprep.subr.mxu0 0.0
    %429 = vmatpush1.msra.mxu0 %v198
    %430 = vmatprep.subr.mxu0 0.0
    %431 = vmatpush1.msra.mxu0 %v197
    %432 = vmatprep.subr.mxu0 0.0
    %433 = vmatpush1.msra.mxu0 %v196
    %434 = vmatprep.subr.mxu0 0.0
    %435 = vmatpush1.msra.mxu0 %v195
    %436 = vmatprep.subr.mxu0 0.0
    %437 = vmatpush1.msra.mxu0 %v194
    %438 = vmatprep.subr.mxu0 0.0
    %439 = vmatpush1.msra.mxu0 %v193
    %440 = vmatprep.subr.mxu0 0.0
    %441 = vmatpush1.msra.mxu0 %v192
    %442 = vmatprep.subr.mxu0 0.0
    %443 = vmatpush1.msra.mxu0 %v191
    %444 = vmatprep.subr.mxu0 0.0
    %445 = vmatpush1.msra.mxu0 %v190
    %446 = vmatprep.subr.mxu0 0.0
    %447 = vmatpush1.msra.mxu0 %v189
    %448 = vmatprep.subr.mxu0 0.0
    %449 = vmatpush1.msra.mxu0 %v188
    %450 = vmatprep.subr.mxu0 0.0
    %451 = vmatpush1.msra.mxu0 %v187
    %452 = vmatprep.subr.mxu0 0.0
    %453 = vmatpush2.msra.mxu0 0.0
    %454 = vmatprep.subr.mxu0 0.0
    %455 = vmatpush2.msra.mxu0 0.0
    %456 = vmatprep.subr.mxu0 0.0
    %457 = vmatpush2.msra.mxu0 0.0
    %458 = vmatprep.subr.mxu0 0.0
    %459 = vmatpush2.msra.mxu0 0.0
    %460 = vmatprep.subr.mxu0 0.0
    %461 = vmatpush2.msra.mxu0 0.0
    %462 = vmatprep.subr.mxu0 0.0
    %463 = vmatpush2.msra.mxu0 0.0
    %464 = vmatprep.subr.mxu0 0.0
    %465 = vmatpush2.msra.mxu0 0.0
    %466 = vmatprep.subr.mxu0 0.0
    %467 = vmatpush2.msra.mxu0 0.0
    %468 = vmatprep.subr.mxu0 0.0
    %469 = vmatpush2.msra.mxu0 0.0
    %470 = vmatprep.subr.mxu0 0.0
    %471 = vmatpush2.msra.mxu0 0.0
    %472 = vmatprep.subr.mxu0 0.0
    %473 = vmatpush2.msra.mxu0 0.0
    %474 = vmatprep.subr.mxu0 0.0
    %475 = vmatpush2.msra.mxu0 0.0
    %476 = vmatprep.subr.mxu0 0.0
    %477 = vmatpush2.msra.mxu0 0.0
    %478 = vmatprep.subr.mxu0 0.0
    %479 = vmatpush2.msra.mxu0 0.0
    %480 = vmatprep.subr.mxu0 0.0
    %481 = vmatpush2.msra.mxu0 0.0
    %482 = vmatprep.subr.mxu0 0.0
    %483 = vmatpush2.msra.mxu0 0.0
    %484 = vmatprep.mubr.f32.mxu0 0.0
    %485 = vmatmul.mubr.f32.gmra.mxu0 %v419
    %v486 = vpop.f32.mrf.mxu0
    %v487 = vadd.f32 0.0, %v486
    %v488 = vpop.f32.mrf.mxu0
    %489 = vdwg.mxu0
    %v490 = vadd.f32 %v164, %v487
    %v491 = vtanh.pop %v490
    %492 = vmatprep.subr.mxu0 0.0
    %493 = vmatpush1.msra.mxu0 %v202
    %494 = vmatprep.subr.mxu0 0.0
    %495 = vmatpush1.msra.mxu0 %v201
    %496 = vmatprep.subr.mxu0 0.0
    %497 = vmatpush1.msra.mxu0 %v200
    %498 = vmatprep.subr.mxu0 0.0
    %499 = vmatpush1.msra.mxu0 %v199
    %500 = vmatprep.subr.mxu0 0.0
    %501 = vmatpush1.msra.mxu0 %v198
    %502 = vmatprep.subr.mxu0 0.0
    %503 = vmatpush1.msra.mxu0 %v197
    %504 = vmatprep.subr.mxu0 0.0
    %505 = vmatpush1.msra.mxu0 %v196
    %506 = vmatprep.subr.mxu0 0.0
    %507 = vmatpush1.msra.mxu0 %v195
    %508 = vmatprep.subr.mxu0 0.0
    %509 = vmatpush1.msra.mxu0 %v194
    %510 = vmatprep.subr.mxu0 0.0
    %511 = vmatpush1.msra.mxu0 %v193
    %512 = vmatprep.subr.mxu0 0.0
    %513 = vmatpush1.msra.mxu0 %v192
    %514 = vmatprep.subr.mxu0 0.0
    %515 = vmatpush1.msra.mxu0 %v191
    %516 = vmatprep.subr.mxu0 0.0
    %517 = vmatpush1.msra.mxu0 %v190
    %518 = vmatprep.subr.mxu0 0.0
    %519 = vmatpush1.msra.mxu0 %v189
    %520 = vmatprep.subr.mxu0 0.0
    %521 = vmatpush1.msra.mxu0 %v188
    %522 = vmatprep.subr.mxu0 0.0
    %523 = vmatpush1.msra.mxu0 %v187
    %524 = vmatprep.subr.mxu0 0.0
    %525 = vmatpush2.msra.mxu0 0.0
    %526 = vmatprep.subr.mxu0 0.0
    %527 = vmatpush2.msra.mxu0 0.0
    %528 = vmatprep.subr.mxu0 0.0
    %529 = vmatpush2.msra.mxu0 0.0
    %530 = vmatprep.subr.mxu0 0.0
    %531 = vmatpush2.msra.mxu0 0.0
    %532 = vmatprep.subr.mxu0 0.0
    %533 = vmatpush2.msra.mxu0 0.0
    %534 = vmatprep.subr.mxu0 0.0
    %535 = vmatpush2.msra.mxu0 0.0
    %536 = vmatprep.subr.mxu0 0.0
    %537 = vmatpush2.msra.mxu0 0.0
    %538 = vmatprep.subr.mxu0 0.0
    %539 = vmatpush2.msra.mxu0 0.0
    %540 = vmatprep.subr.mxu0 0.0
    %541 = vmatpush2.msra.mxu0 0.0
    %542 = vmatprep.subr.mxu0 0.0
    %543 = vmatpush2.msra.mxu0 0.0
    %544 = vmatprep.subr.mxu0 0.0
    %545 = vmatpush2.msra.mxu0 0.0
    %546 = vmatprep.subr.mxu0 0.0
    %547 = vmatpush2.msra.mxu0 0.0
    %548 = vmatprep.subr.mxu0 0.0
    %549 = vmatpush2.msra.mxu0 0.0
    %550 = vmatprep.subr.mxu0 0.0
    %551 = vmatpush2.msra.mxu0 0.0
    %552 = vmatprep.subr.mxu0 0.0
    %553 = vmatpush2.msra.mxu0 0.0
    %554 = vmatprep.subr.mxu0 0.0
    %555 = vmatpush2.msra.mxu0 0.0
    %556 = vmatprep.mubr.f32.mxu0 0.0
    %557 = vmatmul.mubr.f32.gmra.mxu0 %v491
    %v558 = vpop.f32.mrf.mxu0
    %v559 = vadd.f32 0.0, %v558
    %v560 = vpop.f32.mrf.mxu0
    %561 = vdwg.mxu0
    %v562 = vadd.f32 %v169, %v559
    %v563 = vtanh.pop %v562
    %564 = vmatprep.subr.mxu0 0.0
    %565 = vmatpush1.msra.mxu0 %v202
    %566 = vmatprep.subr.mxu0 0.0
    %567 = vmatpush1.msra.mxu0 %v201
    %568 = vmatprep.subr.mxu0 0.0
    %569 = vmatpush1.msra.mxu0 %v200
    %570 = vmatprep.subr.mxu0 0.0
    %571 = vmatpush1.msra.mxu0 %v199
    %572 = vmatprep.subr.mxu0 0.0
    %573 = vmatpush1.msra.mxu0 %v198
    %574 = vmatprep.subr.mxu0 0.0
    %575 = vmatpush1.msra.mxu0 %v197
    %576 = vmatprep.subr.mxu0 0.0
    %577 = vmatpush1.msra.mxu0 %v196
    %578 = vmatprep.subr.mxu0 0.0
    %579 = vmatpush1.msra.mxu0 %v195
    %580 = vmatprep.subr.mxu0 0.0
    %581 = vmatpush1.msra.mxu0 %v194
    %582 = vmatprep.subr.mxu0 0.0
    %583 = vmatpush1.msra.mxu0 %v193
    %584 = vmatprep.subr.mxu0 0.0
    %585 = vmatpush1.msra.mxu0 %v192
    %586 = vmatprep.subr.mxu0 0.0
    %587 = vmatpush1.msra.mxu0 %v191
    %588 = vmatprep.subr.mxu0 0.0
    %589 = vmatpush1.msra.mxu0 %v190
    %590 = vmatprep.subr.mxu0 0.0
    %591 = vmatpush1.msra.mxu0 %v189
    %592 = vmatprep.subr.mxu0 0.0
    %593 = vmatpush1.msra.mxu0 %v188
    %594 = vmatprep.subr.mxu0 0.0
    %595 = vmatpush1.msra.mxu0 %v187
    %596 = vmatprep.subr.mxu0 0.0
    %597 = vmatpush2.msra.mxu0 0.0
    %598 = vmatprep.subr.mxu0 0.0
    %599 = vmatpush2.msra.mxu0 0.0
    %600 = vmatprep.subr.mxu0 0.0
    %601 = vmatpush2.msra.mxu0 0.0
    %602 = vmatprep.subr.mxu0 0.0
    %603 = vmatpush2.msra.mxu0 0.0
    %604 = vmatprep.subr.mxu0 0.0
    %605 = vmatpush2.msra.mxu0 0.0
    %606 = vmatprep.subr.mxu0 0.0
    %607 = vmatpush2.msra.mxu0 0.0
    %608 = vmatprep.subr.mxu0 0.0
    %609 = vmatpush2.msra.mxu0 0.0
    %610 = vmatprep.subr.mxu0 0.0
    %611 = vmatpush2.msra.mxu0 0.0
    %612 = vmatprep.subr.mxu0 0.0
    %613 = vmatpush2.msra.mxu0 0.0
    %614 = vmatprep.subr.mxu0 0.0
    %615 = vmatpush2.msra.mxu0 0.0
    %616 = vmatprep.subr.mxu0 0.0
    %617 = vmatpush2.msra.mxu0 0.0
    %618 = vmatprep.subr.mxu0 0.0
    %619 = vmatpush2.msra.mxu0 0.0
    %620 = vmatprep.subr.mxu0 0.0
    %621 = vmatpush2.msra.mxu0 0.0
    %622 = vmatprep.subr.mxu0 0.0
    %623 = vmatpush2.msra.mxu0 0.0
    %624 = vmatprep.subr.mxu0 0.0
    %625 = vmatpush2.msra.mxu0 0.0
    %626 = vmatprep.subr.mxu0 0.0
    %627 = vmatpush2.msra.mxu0 0.0
    %628 = vmatprep.mubr.f32.mxu0 0.0
    %629 = vmatmul.mubr.f32.gmra.mxu0 %v563
    %v630 = vpop.f32.mrf.mxu0
    %v631 = vadd.f32 0.0, %v630
    %v632 = vpop.f32.mrf.mxu0
    %633 = vdwg.mxu0
    %v634 = vadd.f32 %v174, %v631
    %v635 = vtanh.pop %v634
    %636 = vmatprep.subr.mxu0 0.0
    %637 = vmatpush1.msra.mxu0 %v202
    %638 = vmatprep.subr.mxu0 0.0
    %639 = vmatpush1.msra.mxu0 %v201
    %640 = vmatprep.subr.mxu0 0.0
    %641 = vmatpush1.msra.mxu0 %v200
    %642 = vmatprep.subr.mxu0 0.0
    %643 = vmatpush1.msra.mxu0 %v199
    %644 = vmatprep.subr.mxu0 0.0
    %645 = vmatpush1.msra.mxu0 %v198
    %646 = vmatprep.subr.mxu0 0.0
    %647 = vmatpush1.msra.mxu0 %v197
    %648 = vmatprep.subr.mxu0 0.0
    %649 = vmatpush1.msra.mxu0 %v196
    %650 = vmatprep.subr.mxu0 0.0
    %651 = vmatpush1.msra.mxu0 %v195
    %652 = vmatprep.subr.mxu0 0.0
    %653 = vmatpush1.msra.mxu0 %v194
    %654 = vmatprep.subr.mxu0 0.0
    %655 = vmatpush1.msra.mxu0 %v193
    %656 = vmatprep.subr.mxu0 0.0
    %657 = vmatpush1.msra.mxu0 %v192
    %658 = vmatprep.subr.mxu0 0.0
    %659 = vmatpush1.msra.mxu0 %v191
    %660 = vmatprep.subr.mxu0 0.0
    %661 = vmatpush1.msra.mxu0 %v190
    %662 = vmatprep.subr.mxu0 0.0
    %663 = vmatpush1.msra.mxu0 %v189
    %664 = vmatprep.subr.mxu0 0.0
    %665 = vmatpush1.msra.mxu0 %v188
    %666 = vmatprep.subr.mxu0 0.0
    %667 = vmatpush1.msra.mxu0 %v187
    %668 = vmatprep.subr.mxu0 0.0
    %669 = vmatpush2.msra.mxu0 0.0
    %670 = vmatprep.subr.mxu0 0.0
    %671 = vmatpush2.msra.mxu0 0.0
    %672 = vmatprep.subr.mxu0 0.0
    %673 = vmatpush2.msra.mxu0 0.0
    %674 = vmatprep.subr.mxu0 0.0
    %675 = vmatpush2.msra.mxu0 0.0
    %676 = vmatprep.subr.mxu0 0.0
    %677 = vmatpush2.msra.mxu0 0.0
    %678 = vmatprep.subr.mxu0 0.0
    %679 = vmatpush2.msra.mxu0 0.0
    %680 = vmatprep.subr.mxu0 0.0
    %681 = vmatpush2.msra.mxu0 0.0
    %682 = vmatprep.subr.mxu0 0.0
    %683 = vmatpush2.msra.mxu0 0.0
    %684 = vmatprep.subr.mxu0 0.0
    %685 = vmatpush2.msra.mxu0 0.0
    %686 = vmatprep.subr.mxu0 0.0
    %687 = vmatpush2.msra.mxu0 0.0
    %688 = vmatprep.subr.mxu0 0.0
    %689 = vmatpush2.msra.mxu0 0.0
    %690 = vmatprep.subr.mxu0 0.0
    %691 = vmatpush2.msra.mxu0 0.0
    %692 = vmatprep.subr.mxu0 0.0
    %693 = vmatpush2.msra.mxu0 0.0
    %694 = vmatprep.subr.mxu0 0.0
    %695 = vmatpush2.msra.mxu0 0.0
    %696 = vmatprep.subr.mxu0 0.0
    %697 = vmatpush2.msra.mxu0 0.0
    %698 = vmatprep.subr.mxu0 0.0
    %699 = vmatpush2.msra.mxu0 0.0
    %700 = vmatprep.mubr.f32.mxu0 0.0
    %701 = vmatmul.mubr.f32.gmra.mxu0 %v635
    %v702 = vpop.f32.mrf.mxu0
    %v703 = vadd.f32 0.0, %v702
    %v704 = vpop.f32.mrf.mxu0
    %705 = vdwg.mxu0
    %v706 = vadd.f32 %v179, %v703
    %v707 = vtanh.pop %v706
    %708 = vmatprep.subr.mxu0 0.0
    %709 = vmatpush1.msra.mxu0 %v202
    %710 = vmatprep.subr.mxu0 0.0
    %711 = vmatpush1.msra.mxu0 %v201
    %712 = vmatprep.subr.mxu0 0.0
    %713 = vmatpush1.msra.mxu0 %v200
    %714 = vmatprep.subr.mxu0 0.0
    %715 = vmatpush1.msra.mxu0 %v199
    %716 = vmatprep.subr.mxu0 0.0
    %717 = vmatpush1.msra.mxu0 %v198
    %718 = vmatprep.subr.mxu0 0.0
    %719 = vmatpush1.msra.mxu0 %v197
    %720 = vmatprep.subr.mxu0 0.0
    %721 = vmatpush1.msra.mxu0 %v196
    %722 = vmatprep.subr.mxu0 0.0
    %723 = vmatpush1.msra.mxu0 %v195
    %724 = vmatprep.subr.mxu0 0.0
    %725 = vmatpush1.msra.mxu0 %v194
    %726 = vmatprep.subr.mxu0 0.0
    %727 = vmatpush1.msra.mxu0 %v193
    %728 = vmatprep.subr.mxu0 0.0
    %729 = vmatpush1.msra.mxu0 %v192
    %730 = vmatprep.subr.mxu0 0.0
    %731 = vmatpush1.msra.mxu0 %v191
    %732 = vmatprep.subr.mxu0 0.0
    %733 = vmatpush1.msra.mxu0 %v190
    %734 = vmatprep.subr.mxu0 0.0
    %735 = vmatpush1.msra.mxu0 %v189
    %736 = vmatprep.subr.mxu0 0.0
    %737 = vmatpush1.msra.mxu0 %v188
    %738 = vmatprep.subr.mxu0 0.0
    %739 = vmatpush1.msra.mxu0 %v187
    %740 = vmatprep.subr.mxu0 0.0
    %741 = vmatpush2.msra.mxu0 0.0
    %742 = vmatprep.subr.mxu0 0.0
    %743 = vmatpush2.msra.mxu0 0.0
    %744 = vmatprep.subr.mxu0 0.0
    %745 = vmatpush2.msra.mxu0 0.0
    %746 = vmatprep.subr.mxu0 0.0
    %747 = vmatpush2.msra.mxu0 0.0
    %748 = vmatprep.subr.mxu0 0.0
    %749 = vmatpush2.msra.mxu0 0.0
    %750 = vmatprep.subr.mxu0 0.0
    %751 = vmatpush2.msra.mxu0 0.0
    %752 = vmatprep.subr.mxu0 0.0
    %753 = vmatpush2.msra.mxu0 0.0
    %754 = vmatprep.subr.mxu0 0.0
    %755 = vmatpush2.msra.mxu0 0.0
    %756 = vmatprep.subr.mxu0 0.0
    %757 = vmatpush2.msra.mxu0 0.0
    %758 = vmatprep.subr.mxu0 0.0
    %759 = vmatpush2.msra.mxu0 0.0
    %760 = vmatprep.subr.mxu0 0.0
    %761 = vmatpush2.msra.mxu0 0.0
    %762 = vmatprep.subr.mxu0 0.0
    %763 = vmatpush2.msra.mxu0 0.0
    %764 = vmatprep.subr.mxu0 0.0
    %765 = vmatpush2.msra.mxu0 0.0
    %766 = vmatprep.subr.mxu0 0.0
    %767 = vmatpush2.msra.mxu0 0.0
    %768 = vmatprep.subr.mxu0 0.0
    %769 = vmatpush2.msra.mxu0 0.0
    %770 = vmatprep.subr.mxu0 0.0
    %771 = vmatpush2.msra.mxu0 0.0
    %772 = vmatprep.mubr.f32.mxu0 0.0
    %773 = vmatmul.mubr.f32.gmra.mxu0 %v707
    %v774 = vpop.f32.mrf.mxu0
    %v775 = vadd.f32 0.0, %v774
    %v776 = vpop.f32.mrf.mxu0
    %777 = vdwg.mxu0
    %v778 = vadd.f32 %v184, %v775
    %v779 = vtanh.pop %v778
    %780 = vst [vmem:[#allocation2] sm:$0xff] %v779
    // Predicated region
    $region26: #{tpu_custom_call.1} parent=1 // pred_check
      %p781 = pneg %p32
    $region27: #{tpu_custom_call.1} parent=1 // pred_check_branch
      %783 = sbr.rel (%p781) target = $region29
    $region28: #{tpu_custom_call.1} parent=1 // pred_region
      %784 = vst [vmem:[#allocation6] sm:$0xff] %v779
    $region29: #{tpu_custom_call.1} parent=1 // pred_fallthru
      _
    // Predicated region
    $region30: #{tpu_custom_call.1} parent=1 // pred_check
      _
    $region31: #{tpu_custom_call.1} parent=1 // pred_check_branch
      %786 = sbr.rel (0) target = $region33
    $region32: #{tpu_custom_call.1} parent=1 // pred_region
      %s788 = ssub.s32 128, 128
      %789 = vsyncadd [#allocation5], %s788
      %s791 = sshll.u32 [#allocation6], 4
      %s792 = int_to_ptr.vmem [resolvable:$true] %s791
      %794 = dma.vmem_to_hbm [thread:$0]  %s792, 128, %s4, [#allocation5]
    $region33: #{tpu_custom_call.1} parent=1 // pred_fallthru
      _
    // Predicated region
    $region34: #{tpu_custom_call.1} parent=1 // pred_check
      _
    $region35: #{tpu_custom_call.1} parent=1 // pred_check_branch
      %796 = sbr.rel (0) target = $region37
    $region36: #{tpu_custom_call.1} parent=1 // pred_region
      %797 = dma.done [#allocation5], 128
    $region37: #{tpu_custom_call.1} parent=1 // pred_fallthru
      _
    %798 = vsyncpa [#allocation4], 1
    %799 = vsyncpa [#allocation5], 1

// kernel: tpu_custom_call.1
$region0: #{tpu_custom_call.1}
  #allocation0 [shape = 'u32[]', space=smem, size = 0x4, offset = 0x4, fixed_abs, tag = 'smem constant byte address 0x4 - core index']
  #allocation1 [shape = 'u32[144,128]{1,0:T(1,128)}', space=vmem, size = 0x12000, scoped, tag = 'internal scratch']
  #allocation2 [shape = 'f32[8,128]{1,0:T(8,128)}', space=vmem, size = 0x1000, scoped, tag = 'scratch operand']
  %s0 = inlined_call_operand.vmem [shape: f32[8,8,4], index: 0, kind: input, shape index: {}]
  %s1 = inlined_call_operand.vmem [shape: f32[4,128], index: 1, kind: input, shape index: {}]
  %s2 = inlined_call_operand.hbm [shape: f32[128,128], index: 2, kind: input, shape index: {}]
  %s3 = inlined_call_operand.vmem [shape: f32[1,128], index: 3, kind: input, shape index: {}]
  %s4 = inlined_call_operand.hbm [shape: f32[8,128], index: 4, kind: output, shape index: {}]
  %s5 = sld [smem:[#allocation0]]
  $region38: #{tpu_custom_call.1} parent=0
    _
  %s7 = ssub.s32 1, %s5
  %s8 = scalar_select 0, %s7, %s5
  $region1: #{tpu_custom_call.1} parent=0
    #allocation3 [shape = 'u8[65536]{0}', space=vmem, size = 0x10000, scoped, tag = 'input window, operand 2, single buffered']
    #allocation4 [shape = 's32[1]{0}', space=sflag, size = 0x4, scoped, tag = 'scoped memory for tpu_custom_call.1']
    #allocation5 [shape = 's32[1]{0}', space=sflag, size = 0x4, scoped, tag = 'scoped memory for tpu_custom_call.1']
    #allocation6 [shape = 'u8[4096]{0}', space=vmem, size = 0x1000, scoped, tag = 'output window, operand 0, single buffered']
    %9 = vsyncpa [#allocation4], 0
    %10 = vsyncpa [#allocation5], 0
    // Predicated region
    $region2: #{tpu_custom_call.1} parent=1 // pred_check
      _
    $region3: #{tpu_custom_call.1} parent=1 // pred_check_branch
      %12 = sbr.rel (0) target = $region5
    $region4: #{tpu_custom_call.1} parent=1 // pred_region
      _
    $region5: #{tpu_custom_call.1} parent=1 // pred_fallthru
      _
    // Predicated region
    $region6: #{tpu_custom_call.1} parent=1 // pred_check
      _
    $region7: #{tpu_custom_call.1} parent=1 // pred_check_branch
      %14 = sbr.rel (0) target = $region9
    $region8: #{tpu_custom_call.1} parent=1 // pred_region
      _
    $region9: #{tpu_custom_call.1} parent=1 // pred_fallthru
      _
    // Predicated region
    $region10: #{tpu_custom_call.1} parent=1 // pred_check
      _
    $region11: #{tpu_custom_call.1} parent=1 // pred_check_branch
      %16 = sbr.rel (0) target = $region13
    $region12: #{tpu_custom_call.1} parent=1 // pred_region
      %s18 = ssub.s32 2048, 2048
      %19 = vsyncadd [#allocation4], %s18
      %s20 = sshll.u32 [#allocation3], 4
      %s21 = int_to_ptr.vmem [resolvable:$true] %s20
      %26 = dma.hbm_to_vmem [thread:$0]  %s2, 2048, %s21, [#allocation4], 128, 128, 8
    $region13: #{tpu_custom_call.1} parent=1 // pred_fallthru
      _
    // Predicated region
    $region14: #{tpu_custom_call.1} parent=1 // pred_check
      _
    $region15: #{tpu_custom_call.1} parent=1 // pred_check_branch
      %28 = sbr.rel (0) target = $region17
    $region16: #{tpu_custom_call.1} parent=1 // pred_region
      _
    $region17: #{tpu_custom_call.1} parent=1 // pred_fallthru
      _
    // Predicated region
    $region18: #{tpu_custom_call.1} parent=1 // pred_check
      _
    $region19: #{tpu_custom_call.1} parent=1 // pred_check_branch
      %30 = sbr.rel (0) target = $region21
    $region20: #{tpu_custom_call.1} parent=1 // pred_region
      %31 = dma.done [#allocation4], 2048
    $region21: #{tpu_custom_call.1} parent=1 // pred_fallthru
      _
    %p32 = scmp.eq.s32.totalorder 0, 0
    // Predicated region
    $region22: #{tpu_custom_call.1} parent=1 // pred_check
      %p33 = pneg %p32
    $region23: #{tpu_custom_call.1} parent=1 // pred_check_branch
      %35 = sbr.rel (%p33) target = $region25
    $region24: #{tpu_custom_call.1} parent=1 // pred_region
      %36 = vst [vmem:[#allocation2] sm:$0xff] 0.0
    $region25: #{tpu_custom_call.1} parent=1 // pred_fallthru
      _
    %v37 = vld [vmem:[%s0] sm:$0xff]
    %v38 = vld [vmem:[%s0 + $0x8] sm:$0xff]
    %v39 = vld [vmem:[%s0 + $0x10] sm:$0xff]
    %v40 = vld [vmem:[%s0 + $0x18] sm:$0xff]
    %v41 = vld [vmem:[%s0 + $0x20] sm:$0xff]
    %v42 = vld [vmem:[%s0 + $0x28] sm:$0xff]
    %v43 = vld [vmem:[%s0 + $0x30] sm:$0xff]
    %v44 = vld [vmem:[%s0 + $0x38] sm:$0xff]
    %v45 = vld [vmem:[%s1] sm:$0xf]
    %v46 = vld [vmem:[%s3] sm:$0x1]
    %v48 = vlaneseq
    %v49 = vshrl.u32 %v48, 7
    %v50 = vsub.s32 0, %v49
    %v51 = vrot.slane %v46, %v50
    %vm53 = vcmask 31744
    %v55 = vsel %vm53, %v37, 0
    %v58 = vsel %vm53, %v38, 0
    %v61 = vsel %vm53, %v39, 0
    %v64 = vsel %vm53, %v40, 0
    %v67 = vsel %vm53, %v41, 0
    %v70 = vsel %vm53, %v42, 0
    %v73 = vsel %vm53, %v43, 0
    %v76 = vsel %vm53, %v44, 0
    %vm78 = vcmask 1043456
    %v80 = vsel %vm78, %v45, 0
    %82 = vmatprep.subr.mxu0 0.0
    %83 = vmatpush1.msra.mxu0 0.0
    %84 = vmatprep.subr.mxu0 0.0
    %85 = vmatpush1.msra.mxu0 0.0
    %86 = vmatprep.subr.mxu0 0.0
    %87 = vmatpush1.msra.mxu0 0.0
    %88 = vmatprep.subr.mxu0 0.0
    %89 = vmatpush1.msra.mxu0 0.0
    %90 = vmatprep.subr.mxu0 0.0
    %91 = vmatpush1.msra.mxu0 0.0
    %92 = vmatprep.subr.mxu0 0.0
    %93 = vmatpush1.msra.mxu0 0.0
    %94 = vmatprep.subr.mxu0 0.0
    %95 = vmatpush1.msra.mxu0 0.0
    %96 = vmatprep.subr.mxu0 0.0
    %97 = vmatpush1.msra.mxu0 0.0
    %98 = vmatprep.subr.mxu0 0.0
    %99 = vmatpush1.msra.mxu0 0.0
    %100 = vmatprep.subr.mxu0 0.0
    %101 = vmatpush1.msra.mxu0 0.0
    %102 = vmatprep.subr.mxu0 0.0
    %103 = vmatpush1.msra.mxu0 0.0
    %104 = vmatprep.subr.mxu0 0.0
    %105 = vmatpush1.msra.mxu0 0.0
    %106 = vmatprep.subr.mxu0 0.0
    %107 = vmatpush1.msra.mxu0 0.0
    %108 = vmatprep.subr.mxu0 0.0
    %109 = vmatpush1.msra.mxu0 0.0
    %110 = vmatprep.subr.mxu0 0.0
    %111 = vmatpush1.msra.mxu0 0.0
    %112 = vmatprep.subr.mxu0 0.0
    %113 = vmatpush1.msra.mxu0 %v80
    %114 = vmatprep.subr.mxu0 0.0
    %115 = vmatpush2.msra.mxu0 0.0
    %116 = vmatprep.subr.mxu0 0.0
    %117 = vmatpush2.msra.mxu0 0.0
    %118 = vmatprep.subr.mxu0 0.0
    %119 = vmatpush2.msra.mxu0 0.0
    %120 = vmatprep.subr.mxu0 0.0
    %121 = vmatpush2.msra.mxu0 0.0
    %122 = vmatprep.subr.mxu0 0.0
    %123 = vmatpush2.msra.mxu0 0.0
    %124 = vmatprep.subr.mxu0 0.0
    %125 = vmatpush2.msra.mxu0 0.0
    %126 = vmatprep.subr.mxu0 0.0
    %127 = vmatpush2.msra.mxu0 0.0
    %128 = vmatprep.subr.mxu0 0.0
    %129 = vmatpush2.msra.mxu0 0.0
    %130 = vmatprep.subr.mxu0 0.0
    %131 = vmatpush2.msra.mxu0 0.0
    %132 = vmatprep.subr.mxu0 0.0
    %133 = vmatpush2.msra.mxu0 0.0
    %134 = vmatprep.subr.mxu0 0.0
    %135 = vmatpush2.msra.mxu0 0.0
    %136 = vmatprep.subr.mxu0 0.0
    %137 = vmatpush2.msra.mxu0 0.0
    %138 = vmatprep.subr.mxu0 0.0
    %139 = vmatpush2.msra.mxu0 0.0
    %140 = vmatprep.subr.mxu0 0.0
    %141 = vmatpush2.msra.mxu0 0.0
    %142 = vmatprep.subr.mxu0 0.0
    %143 = vmatpush2.msra.mxu0 0.0
    %144 = vmatprep.subr.mxu0 0.0
    %145 = vmatpush2.msra.mxu0 0.0
    %146 = vmatprep.mubr.f32.mxu0 0.0
    %147 = vmatmul.mubr.f32.gmra.mxu0 %v55
    %v148 = vpop.f32.mrf.mxu0
    %v149 = vadd.f32 %v51, %v148
    %v150 = vpop.f32.mrf.mxu0
    %151 = vmatprep.mubr.f32.mxu0 0.0
    %152 = vmatmul.mubr.f32.gmra.mxu0 %v58
    %v153 = vpop.f32.mrf.mxu0
    %v154 = vadd.f32 %v51, %v153
    %v155 = vpop.f32.mrf.mxu0
    %156 = vmatprep.mubr.f32.mxu0 0.0
    %157 = vmatmul.mubr.f32.gmra.mxu0 %v61
    %v158 = vpop.f32.mrf.mxu0
    %v159 = vadd.f32 %v51, %v158
    %v160 = vpop.f32.mrf.mxu0
    %161 = vmatprep.mubr.f32.mxu0 0.0
    %162 = vmatmul.mubr.f32.gmra.mxu0 %v64
    %v163 = vpop.f32.mrf.mxu0
    %v164 = vadd.f32 %v51, %v163
    %v165 = vpop.f32.mrf.mxu0
    %166 = vmatprep.mubr.f32.mxu0 0.0
    %167 = vmatmul.mubr.f32.gmra.mxu0 %v67
    %v168 = vpop.f32.mrf.mxu0
    %v169 = vadd.f32 %v51, %v168
    %v170 = vpop.f32.mrf.mxu0
    %171 = vmatprep.mubr.f32.mxu0 0.0
    %172 = vmatmul.mubr.f32.gmra.mxu0 %v70
    %v173 = vpop.f32.mrf.mxu0
    %v174 = vadd.f32 %v51, %v173
    %v175 = vpop.f32.mrf.mxu0
    %176 = vmatprep.mubr.f32.mxu0 0.0
    %177 = vmatmul.mubr.f32.gmra.mxu0 %v73
    %v178 = vpop.f32.mrf.mxu0
    %v179 = vadd.f32 %v51, %v178
    %v180 = vpop.f32.mrf.mxu0
    %181 = vmatprep.mubr.f32.mxu0 0.0
    %182 = vmatmul.mubr.f32.gmra.mxu0 %v76
    %v183 = vpop.f32.mrf.mxu0
    %v184 = vadd.f32 %v51, %v183
    %v185 = vpop.f32.mrf.mxu0
    %186 = vdwg.mxu0
    %v187 = vld [vmem:[#allocation3] sm:$0xff]
    %v188 = vld [vmem:[#allocation3 + $0x8] sm:$0xff]
    %v189 = vld [vmem:[#allocation3 + $0x10] sm:$0xff]
    %v190 = vld [vmem:[#allocation3 + $0x18] sm:$0xff]
    %v191 = vld [vmem:[#allocation3 + $0x20] sm:$0xff]
    %v192 = vld [vmem:[#allocation3 + $0x28] sm:$0xff]
    %v193 = vld [vmem:[#allocation3 + $0x30] sm:$0xff]
    %v194 = vld [vmem:[#allocation3 + $0x38] sm:$0xff]
    %v195 = vld [vmem:[#allocation3 + $0x40] sm:$0xff]
    %v196 = vld [vmem:[#allocation3 + $0x48] sm:$0xff]
    %v197 = vld [vmem:[#allocation3 + $0x50] sm:$0xff]
    %v198 = vld [vmem:[#allocation3 + $0x58] sm:$0xff]
    %v199 = vld [vmem:[#allocation3 + $0x60] sm:$0xff]
    %v200 = vld [vmem:[#allocation3 + $0x68] sm:$0xff]
    %v201 = vld [vmem:[#allocation3 + $0x70] sm:$0xff]
    %v202 = vld [vmem:[#allocation3 + $0x78] sm:$0xff]
    %v203 = vld [vmem:[#allocation2] sm:$0xff]
    %204 = vmatprep.subr.mxu0 0.0
    %205 = vmatpush1.msra.mxu0 %v202
    %206 = vmatprep.subr.mxu0 0.0
    %207 = vmatpush1.msra.mxu0 %v201
    %208 = vmatprep.subr.mxu0 0.0
    %209 = vmatpush1.msra.mxu0 %v200
    %210 = vmatprep.subr.mxu0 0.0
    %211 = vmatpush1.msra.mxu0 %v199
    %212 = vmatprep.subr.mxu0 0.0
    %213 = vmatpush1.msra.mxu0 %v198
    %214 = vmatprep.subr.mxu0 0.0
    %215 = vmatpush1.msra.mxu0 %v197
    %216 = vmatprep.subr.mxu0 0.0
    %217 = vmatpush1.msra.mxu0 %v196
    %218 = vmatprep.subr.mxu0 0.0
    %219 = vmatpush1.msra.mxu0 %v195
    %220 = vmatprep.subr.mxu0 0.0
    %221 = vmatpush1.msra.mxu0 %v194
    %222 = vmatprep.subr.mxu0 0.0
    %223 = vmatpush1.msra.mxu0 %v193
    %224 = vmatprep.subr.mxu0 0.0
    %225 = vmatpush1.msra.mxu0 %v192
    %226 = vmatprep.subr.mxu0 0.0
    %227 = vmatpush1.msra.mxu0 %v191
    %228 = vmatprep.subr.mxu0 0.0
    %229 = vmatpush1.msra.mxu0 %v190
    %230 = vmatprep.subr.mxu0 0.0
    %231 = vmatpush1.msra.mxu0 %v189
    %232 = vmatprep.subr.mxu0 0.0
    %233 = vmatpush1.msra.mxu0 %v188
    %234 = vmatprep.subr.mxu0 0.0
    %235 = vmatpush1.msra.mxu0 %v187
    %236 = vmatprep.subr.mxu0 0.0
    %237 = vmatpush2.msra.mxu0 0.0
    %238 = vmatprep.subr.mxu0 0.0
    %239 = vmatpush2.msra.mxu0 0.0
    %240 = vmatprep.subr.mxu0 0.0
    %241 = vmatpush2.msra.mxu0 0.0
    %242 = vmatprep.subr.mxu0 0.0
    %243 = vmatpush2.msra.mxu0 0.0
    %244 = vmatprep.subr.mxu0 0.0
    %245 = vmatpush2.msra.mxu0 0.0
    %246 = vmatprep.subr.mxu0 0.0
    %247 = vmatpush2.msra.mxu0 0.0
    %248 = vmatprep.subr.mxu0 0.0
    %249 = vmatpush2.msra.mxu0 0.0
    %250 = vmatprep.subr.mxu0 0.0
    %251 = vmatpush2.msra.mxu0 0.0
    %252 = vmatprep.subr.mxu0 0.0
    %253 = vmatpush2.msra.mxu0 0.0
    %254 = vmatprep.subr.mxu0 0.0
    %255 = vmatpush2.msra.mxu0 0.0
    %256 = vmatprep.subr.mxu0 0.0
    %257 = vmatpush2.msra.mxu0 0.0
    %258 = vmatprep.subr.mxu0 0.0
    %259 = vmatpush2.msra.mxu0 0.0
    %260 = vmatprep.subr.mxu0 0.0
    %261 = vmatpush2.msra.mxu0 0.0
    %262 = vmatprep.subr.mxu0 0.0
    %263 = vmatpush2.msra.mxu0 0.0
    %264 = vmatprep.subr.mxu0 0.0
    %265 = vmatpush2.msra.mxu0 0.0
    %266 = vmatprep.subr.mxu0 0.0
    %267 = vmatpush2.msra.mxu0 0.0
    %268 = vmatprep.mubr.f32.mxu0 0.0
    %269 = vmatmul.mubr.f32.gmra.mxu0 %v203
    %v270 = vpop.f32.mrf.mxu0
    %v271 = vadd.f32 0.0, %v270
    %v272 = vpop.f32.mrf.mxu0
    %273 = vdwg.mxu0
    %v274 = vadd.f32 %v149, %v271
    %v275 = vtanh.pop %v274
    %276 = vmatprep.subr.mxu0 0.0
    %277 = vmatpush1.msra.mxu0 %v202
    %278 = vmatprep.subr.mxu0 0.0
    %279 = vmatpush1.msra.mxu0 %v201
    %280 = vmatprep.subr.mxu0 0.0
    %281 = vmatpush1.msra.mxu0 %v200
    %282 = vmatprep.subr.mxu0 0.0
    %283 = vmatpush1.msra.mxu0 %v199
    %284 = vmatprep.subr.mxu0 0.0
    %285 = vmatpush1.msra.mxu0 %v198
    %286 = vmatprep.subr.mxu0 0.0
    %287 = vmatpush1.msra.mxu0 %v197
    %288 = vmatprep.subr.mxu0 0.0
    %289 = vmatpush1.msra.mxu0 %v196
    %290 = vmatprep.subr.mxu0 0.0
    %291 = vmatpush1.msra.mxu0 %v195
    %292 = vmatprep.subr.mxu0 0.0
    %293 = vmatpush1.msra.mxu0 %v194
    %294 = vmatprep.subr.mxu0 0.0
    %295 = vmatpush1.msra.mxu0 %v193
    %296 = vmatprep.subr.mxu0 0.0
    %297 = vmatpush1.msra.mxu0 %v192
    %298 = vmatprep.subr.mxu0 0.0
    %299 = vmatpush1.msra.mxu0 %v191
    %300 = vmatprep.subr.mxu0 0.0
    %301 = vmatpush1.msra.mxu0 %v190
    %302 = vmatprep.subr.mxu0 0.0
    %303 = vmatpush1.msra.mxu0 %v189
    %304 = vmatprep.subr.mxu0 0.0
    %305 = vmatpush1.msra.mxu0 %v188
    %306 = vmatprep.subr.mxu0 0.0
    %307 = vmatpush1.msra.mxu0 %v187
    %308 = vmatprep.subr.mxu0 0.0
    %309 = vmatpush2.msra.mxu0 0.0
    %310 = vmatprep.subr.mxu0 0.0
    %311 = vmatpush2.msra.mxu0 0.0
    %312 = vmatprep.subr.mxu0 0.0
    %313 = vmatpush2.msra.mxu0 0.0
    %314 = vmatprep.subr.mxu0 0.0
    %315 = vmatpush2.msra.mxu0 0.0
    %316 = vmatprep.subr.mxu0 0.0
    %317 = vmatpush2.msra.mxu0 0.0
    %318 = vmatprep.subr.mxu0 0.0
    %319 = vmatpush2.msra.mxu0 0.0
    %320 = vmatprep.subr.mxu0 0.0
    %321 = vmatpush2.msra.mxu0 0.0
    %322 = vmatprep.subr.mxu0 0.0
    %323 = vmatpush2.msra.mxu0 0.0
    %324 = vmatprep.subr.mxu0 0.0
    %325 = vmatpush2.msra.mxu0 0.0
    %326 = vmatprep.subr.mxu0 0.0
    %327 = vmatpush2.msra.mxu0 0.0
    %328 = vmatprep.subr.mxu0 0.0
    %329 = vmatpush2.msra.mxu0 0.0
    %330 = vmatprep.subr.mxu0 0.0
    %331 = vmatpush2.msra.mxu0 0.0
    %332 = vmatprep.subr.mxu0 0.0
    %333 = vmatpush2.msra.mxu0 0.0
    %334 = vmatprep.subr.mxu0 0.0
    %335 = vmatpush2.msra.mxu0 0.0
    %336 = vmatprep.subr.mxu0 0.0
    %337 = vmatpush2.msra.mxu0 0.0
    %338 = vmatprep.subr.mxu0 0.0
    %339 = vmatpush2.msra.mxu0 0.0
    %340 = vmatprep.mubr.f32.mxu0 0.0
    %341 = vmatmul.mubr.f32.gmra.mxu0 %v275
    %v342 = vpop.f32.mrf.mxu0
    %v343 = vadd.f32 0.0, %v342
    %v344 = vpop.f32.mrf.mxu0
    %345 = vdwg.mxu0
    %v346 = vadd.f32 %v154, %v343
    %v347 = vtanh.pop %v346
    %348 = vmatprep.subr.mxu0 0.0
    %349 = vmatpush1.msra.mxu0 %v202
    %350 = vmatprep.subr.mxu0 0.0
    %351 = vmatpush1.msra.mxu0 %v201
    %352 = vmatprep.subr.mxu0 0.0
    %353 = vmatpush1.msra.mxu0 %v200
    %354 = vmatprep.subr.mxu0 0.0
    %355 = vmatpush1.msra.mxu0 %v199
    %356 = vmatprep.subr.mxu0 0.0
    %357 = vmatpush1.msra.mxu0 %v198
    %358 = vmatprep.subr.mxu0 0.0
    %359 = vmatpush1.msra.mxu0 %v197
    %360 = vmatprep.subr.mxu0 0.0
    %361 = vmatpush1.msra.mxu0 %v196
    %362 = vmatprep.subr.mxu0 0.0
    %363 = vmatpush1.msra.mxu0 %v195
    %364 = vmatprep.subr.mxu0 0.0
    %365 = vmatpush1.msra.mxu0 %v194
    %366 = vmatprep.subr.mxu0 0.0
    %367 = vmatpush1.msra.mxu0 %v193
    %368 = vmatprep.subr.mxu0 0.0
    %369 = vmatpush1.msra.mxu0 %v192
    %370 = vmatprep.subr.mxu0 0.0
    %371 = vmatpush1.msra.mxu0 %v191
    %372 = vmatprep.subr.mxu0 0.0
    %373 = vmatpush1.msra.mxu0 %v190
    %374 = vmatprep.subr.mxu0 0.0
    %375 = vmatpush1.msra.mxu0 %v189
    %376 = vmatprep.subr.mxu0 0.0
    %377 = vmatpush1.msra.mxu0 %v188
    %378 = vmatprep.subr.mxu0 0.0
    %379 = vmatpush1.msra.mxu0 %v187
    %380 = vmatprep.subr.mxu0 0.0
    %381 = vmatpush2.msra.mxu0 0.0
    %382 = vmatprep.subr.mxu0 0.0
    %383 = vmatpush2.msra.mxu0 0.0
    %384 = vmatprep.subr.mxu0 0.0
    %385 = vmatpush2.msra.mxu0 0.0
    %386 = vmatprep.subr.mxu0 0.0
    %387 = vmatpush2.msra.mxu0 0.0
    %388 = vmatprep.subr.mxu0 0.0
    %389 = vmatpush2.msra.mxu0 0.0
    %390 = vmatprep.subr.mxu0 0.0
    %391 = vmatpush2.msra.mxu0 0.0
    %392 = vmatprep.subr.mxu0 0.0
    %393 = vmatpush2.msra.mxu0 0.0
    %394 = vmatprep.subr.mxu0 0.0
    %395 = vmatpush2.msra.mxu0 0.0
    %396 = vmatprep.subr.mxu0 0.0
    %397 = vmatpush2.msra.mxu0 0.0
    %398 = vmatprep.subr.mxu0 0.0
    %399 = vmatpush2.msra.mxu0 0.0
    %400 = vmatprep.subr.mxu0 0.0
    %401 = vmatpush2.msra.mxu0 0.0
    %402 = vmatprep.subr.mxu0 0.0
    %403 = vmatpush2.msra.mxu0 0.0
    %404 = vmatprep.subr.mxu0 0.0
    %405 = vmatpush2.msra.mxu0 0.0
    %406 = vmatprep.subr.mxu0 0.0
    %407 = vmatpush2.msra.mxu0 0.0
    %408 = vmatprep.subr.mxu0 0.0
    %409 = vmatpush2.msra.mxu0 0.0
    %410 = vmatprep.subr.mxu0 0.0
    %411 = vmatpush2.msra.mxu0 0.0
    %412 = vmatprep.mubr.f32.mxu0 0.0
    %413 = vmatmul.mubr.f32.gmra.mxu0 %v347
    %v414 = vpop.f32.mrf.mxu0
    %v415 = vadd.f32 0.0, %v414
    %v416 = vpop.f32.mrf.mxu0
    %417 = vdwg.mxu0
    %v418 = vadd.f32 %v159, %v415
    %v419 = vtanh.pop %v418
    %420 = vmatprep.subr.mxu0 0.0
    %421 = vmatpush1.msra.mxu0 %v202
    %422 = vmatprep.subr.mxu0 0.0
    %423 = vmatpush1.msra.mxu0 %v201
    %424 = vmatprep.subr.mxu0 0.0
    %425 = vmatpush1.msra.mxu0 %v200
    %426 = vmatprep.subr.mxu0 0.0
    %427 = vmatpush1.msra.mxu0 %v199
    %428 = vmatprep.subr.mxu0 0.0
    %429 = vmatpush1.msra.mxu0 %v198
    %430 = vmatprep.subr.mxu0 0.0
    %431 = vmatpush1.msra.mxu0 %v197
    %432 = vmatprep.subr.mxu0 0.0
    %433 = vmatpush1.msra.mxu0 %v196
    %434 = vmatprep.subr.mxu0 0.0
    %435 = vmatpush1.msra.mxu0 %v195
    %436 = vmatprep.subr.mxu0 0.0
    %437 = vmatpush1.msra.mxu0 %v194
    %438 = vmatprep.subr.mxu0 0.0
    %439 = vmatpush1.msra.mxu0 %v193
    %440 = vmatprep.subr.mxu0 0.0
    %441 = vmatpush1.msra.mxu0 %v192
    %442 = vmatprep.subr.mxu0 0.0
    %443 = vmatpush1.msra.mxu0 %v191
    %444 = vmatprep.subr.mxu0 0.0
    %445 = vmatpush1.msra.mxu0 %v190
    %446 = vmatprep.subr.mxu0 0.0
    %447 = vmatpush1.msra.mxu0 %v189
    %448 = vmatprep.subr.mxu0 0.0
    %449 = vmatpush1.msra.mxu0 %v188
    %450 = vmatprep.subr.mxu0 0.0
    %451 = vmatpush1.msra.mxu0 %v187
    %452 = vmatprep.subr.mxu0 0.0
    %453 = vmatpush2.msra.mxu0 0.0
    %454 = vmatprep.subr.mxu0 0.0
    %455 = vmatpush2.msra.mxu0 0.0
    %456 = vmatprep.subr.mxu0 0.0
    %457 = vmatpush2.msra.mxu0 0.0
    %458 = vmatprep.subr.mxu0 0.0
    %459 = vmatpush2.msra.mxu0 0.0
    %460 = vmatprep.subr.mxu0 0.0
    %461 = vmatpush2.msra.mxu0 0.0
    %462 = vmatprep.subr.mxu0 0.0
    %463 = vmatpush2.msra.mxu0 0.0
    %464 = vmatprep.subr.mxu0 0.0
    %465 = vmatpush2.msra.mxu0 0.0
    %466 = vmatprep.subr.mxu0 0.0
    %467 = vmatpush2.msra.mxu0 0.0
    %468 = vmatprep.subr.mxu0 0.0
    %469 = vmatpush2.msra.mxu0 0.0
    %470 = vmatprep.subr.mxu0 0.0
    %471 = vmatpush2.msra.mxu0 0.0
    %472 = vmatprep.subr.mxu0 0.0
    %473 = vmatpush2.msra.mxu0 0.0
    %474 = vmatprep.subr.mxu0 0.0
    %475 = vmatpush2.msra.mxu0 0.0
    %476 = vmatprep.subr.mxu0 0.0
    %477 = vmatpush2.msra.mxu0 0.0
    %478 = vmatprep.subr.mxu0 0.0
    %479 = vmatpush2.msra.mxu0 0.0
    %480 = vmatprep.subr.mxu0 0.0
    %481 = vmatpush2.msra.mxu0 0.0
    %482 = vmatprep.subr.mxu0 0.0
    %483 = vmatpush2.msra.mxu0 0.0
    %484 = vmatprep.mubr.f32.mxu0 0.0
    %485 = vmatmul.mubr.f32.gmra.mxu0 %v419
    %v486 = vpop.f32.mrf.mxu0
    %v487 = vadd.f32 0.0, %v486
    %v488 = vpop.f32.mrf.mxu0
    %489 = vdwg.mxu0
    %v490 = vadd.f32 %v164, %v487
    %v491 = vtanh.pop %v490
    %492 = vmatprep.subr.mxu0 0.0
    %493 = vmatpush1.msra.mxu0 %v202
    %494 = vmatprep.subr.mxu0 0.0
    %495 = vmatpush1.msra.mxu0 %v201
    %496 = vmatprep.subr.mxu0 0.0
    %497 = vmatpush1.msra.mxu0 %v200
    %498 = vmatprep.subr.mxu0 0.0
    %499 = vmatpush1.msra.mxu0 %v199
    %500 = vmatprep.subr.mxu0 0.0
    %501 = vmatpush1.msra.mxu0 %v198
    %502 = vmatprep.subr.mxu0 0.0
    %503 = vmatpush1.msra.mxu0 %v197
    %504 = vmatprep.subr.mxu0 0.0
    %505 = vmatpush1.msra.mxu0 %v196
    %506 = vmatprep.subr.mxu0 0.0
    %507 = vmatpush1.msra.mxu0 %v195
    %508 = vmatprep.subr.mxu0 0.0
    %509 = vmatpush1.msra.mxu0 %v194
    %510 = vmatprep.subr.mxu0 0.0
    %511 = vmatpush1.msra.mxu0 %v193
    %512 = vmatprep.subr.mxu0 0.0
    %513 = vmatpush1.msra.mxu0 %v192
    %514 = vmatprep.subr.mxu0 0.0
    %515 = vmatpush1.msra.mxu0 %v191
    %516 = vmatprep.subr.mxu0 0.0
    %517 = vmatpush1.msra.mxu0 %v190
    %518 = vmatprep.subr.mxu0 0.0
    %519 = vmatpush1.msra.mxu0 %v189
    %520 = vmatprep.subr.mxu0 0.0
    %521 = vmatpush1.msra.mxu0 %v188
    %522 = vmatprep.subr.mxu0 0.0
    %523 = vmatpush1.msra.mxu0 %v187
    %524 = vmatprep.subr.mxu0 0.0
    %525 = vmatpush2.msra.mxu0 0.0
    %526 = vmatprep.subr.mxu0 0.0
    %527 = vmatpush2.msra.mxu0 0.0
    %528 = vmatprep.subr.mxu0 0.0
    %529 = vmatpush2.msra.mxu0 0.0
    %530 = vmatprep.subr.mxu0 0.0
    %531 = vmatpush2.msra.mxu0 0.0
    %532 = vmatprep.subr.mxu0 0.0
    %533 = vmatpush2.msra.mxu0 0.0
    %534 = vmatprep.subr.mxu0 0.0
    %535 = vmatpush2.msra.mxu0 0.0
    %536 = vmatprep.subr.mxu0 0.0
    %537 = vmatpush2.msra.mxu0 0.0
    %538 = vmatprep.subr.mxu0 0.0
    %539 = vmatpush2.msra.mxu0 0.0
    %540 = vmatprep.subr.mxu0 0.0
    %541 = vmatpush2.msra.mxu0 0.0
    %542 = vmatprep.subr.mxu0 0.0
    %543 = vmatpush2.msra.mxu0 0.0
    %544 = vmatprep.subr.mxu0 0.0
    %545 = vmatpush2.msra.mxu0 0.0
    %546 = vmatprep.subr.mxu0 0.0
    %547 = vmatpush2.msra.mxu0 0.0
    %548 = vmatprep.subr.mxu0 0.0
    %549 = vmatpush2.msra.mxu0 0.0
    %550 = vmatprep.subr.mxu0 0.0
    %551 = vmatpush2.msra.mxu0 0.0
    %552 = vmatprep.subr.mxu0 0.0
    %553 = vmatpush2.msra.mxu0 0.0
    %554 = vmatprep.subr.mxu0 0.0
    %555 = vmatpush2.msra.mxu0 0.0
    %556 = vmatprep.mubr.f32.mxu0 0.0
    %557 = vmatmul.mubr.f32.gmra.mxu0 %v491
    %v558 = vpop.f32.mrf.mxu0
    %v559 = vadd.f32 0.0, %v558
    %v560 = vpop.f32.mrf.mxu0
    %561 = vdwg.mxu0
    %v562 = vadd.f32 %v169, %v559
    %v563 = vtanh.pop %v562
    %564 = vmatprep.subr.mxu0 0.0
    %565 = vmatpush1.msra.mxu0 %v202
    %566 = vmatprep.subr.mxu0 0.0
    %567 = vmatpush1.msra.mxu0 %v201
    %568 = vmatprep.subr.mxu0 0.0
    %569 = vmatpush1.msra.mxu0 %v200
    %570 = vmatprep.subr.mxu0 0.0
    %571 = vmatpush1.msra.mxu0 %v199
    %572 = vmatprep.subr.mxu0 0.0
    %573 = vmatpush1.msra.mxu0 %v198
    %574 = vmatprep.subr.mxu0 0.0
    %575 = vmatpush1.msra.mxu0 %v197
    %576 = vmatprep.subr.mxu0 0.0
    %577 = vmatpush1.msra.mxu0 %v196
    %578 = vmatprep.subr.mxu0 0.0
    %579 = vmatpush1.msra.mxu0 %v195
    %580 = vmatprep.subr.mxu0 0.0
    %581 = vmatpush1.msra.mxu0 %v194
    %582 = vmatprep.subr.mxu0 0.0
    %583 = vmatpush1.msra.mxu0 %v193
    %584 = vmatprep.subr.mxu0 0.0
    %585 = vmatpush1.msra.mxu0 %v192
    %586 = vmatprep.subr.mxu0 0.0
    %587 = vmatpush1.msra.mxu0 %v191
    %588 = vmatprep.subr.mxu0 0.0
    %589 = vmatpush1.msra.mxu0 %v190
    %590 = vmatprep.subr.mxu0 0.0
    %591 = vmatpush1.msra.mxu0 %v189
    %592 = vmatprep.subr.mxu0 0.0
    %593 = vmatpush1.msra.mxu0 %v188
    %594 = vmatprep.subr.mxu0 0.0
    %595 = vmatpush1.msra.mxu0 %v187
    %596 = vmatprep.subr.mxu0 0.0
    %597 = vmatpush2.msra.mxu0 0.0
    %598 = vmatprep.subr.mxu0 0.0
    %599 = vmatpush2.msra.mxu0 0.0
    %600 = vmatprep.subr.mxu0 0.0
    %601 = vmatpush2.msra.mxu0 0.0
    %602 = vmatprep.subr.mxu0 0.0
    %603 = vmatpush2.msra.mxu0 0.0
    %604 = vmatprep.subr.mxu0 0.0
    %605 = vmatpush2.msra.mxu0 0.0
    %606 = vmatprep.subr.mxu0 0.0
    %607 = vmatpush2.msra.mxu0 0.0
    %608 = vmatprep.subr.mxu0 0.0
    %609 = vmatpush2.msra.mxu0 0.0
    %610 = vmatprep.subr.mxu0 0.0
    %611 = vmatpush2.msra.mxu0 0.0
    %612 = vmatprep.subr.mxu0 0.0
    %613 = vmatpush2.msra.mxu0 0.0
    %614 = vmatprep.subr.mxu0 0.0
    %615 = vmatpush2.msra.mxu0 0.0
    %616 = vmatprep.subr.mxu0 0.0
    %617 = vmatpush2.msra.mxu0 0.0
    %618 = vmatprep.subr.mxu0 0.0
    %619 = vmatpush2.msra.mxu0 0.0
    %620 = vmatprep.subr.mxu0 0.0
    %621 = vmatpush2.msra.mxu0 0.0
    %622 = vmatprep.subr.mxu0 0.0
    %623 = vmatpush2.msra.mxu0 0.0
    %624 = vmatprep.subr.mxu0 0.0
    %625 = vmatpush2.msra.mxu0 0.0
    %626 = vmatprep.subr.mxu0 0.0
    %627 = vmatpush2.msra.mxu0 0.0
    %628 = vmatprep.mubr.f32.mxu0 0.0
    %629 = vmatmul.mubr.f32.gmra.mxu0 %v563
    %v630 = vpop.f32.mrf.mxu0
    %v631 = vadd.f32 0.0, %v630
    %v632 = vpop.f32.mrf.mxu0
    %633 = vdwg.mxu0
    %v634 = vadd.f32 %v174, %v631
    %v635 = vtanh.pop %v634
    %636 = vmatprep.subr.mxu0 0.0
    %637 = vmatpush1.msra.mxu0 %v202
    %638 = vmatprep.subr.mxu0 0.0
    %639 = vmatpush1.msra.mxu0 %v201
    %640 = vmatprep.subr.mxu0 0.0
    %641 = vmatpush1.msra.mxu0 %v200
    %642 = vmatprep.subr.mxu0 0.0
    %643 = vmatpush1.msra.mxu0 %v199
    %644 = vmatprep.subr.mxu0 0.0
    %645 = vmatpush1.msra.mxu0 %v198
    %646 = vmatprep.subr.mxu0 0.0
    %647 = vmatpush1.msra.mxu0 %v197
    %648 = vmatprep.subr.mxu0 0.0
    %649 = vmatpush1.msra.mxu0 %v196
    %650 = vmatprep.subr.mxu0 0.0
    %651 = vmatpush1.msra.mxu0 %v195
    %652 = vmatprep.subr.mxu0 0.0
    %653 = vmatpush1.msra.mxu0 %v194
    %654 = vmatprep.subr.mxu0 0.0
    %655 = vmatpush1.msra.mxu0 %v193
    %656 = vmatprep.subr.mxu0 0.0
    %657 = vmatpush1.msra.mxu0 %v192
    %658 = vmatprep.subr.mxu0 0.0
    %659 = vmatpush1.msra.mxu0 %v191
    %660 = vmatprep.subr.mxu0 0.0
    %661 = vmatpush1.msra.mxu0 %v190
    %662 = vmatprep.subr.mxu0 0.0
    %663 = vmatpush1.msra.mxu0 %v189
    %664 = vmatprep.subr.mxu0 0.0
    %665 = vmatpush1.msra.mxu0 %v188
    %666 = vmatprep.subr.mxu0 0.0
    %667 = vmatpush1.msra.mxu0 %v187
    %668 = vmatprep.subr.mxu0 0.0
    %669 = vmatpush2.msra.mxu0 0.0
    %670 = vmatprep.subr.mxu0 0.0
    %671 = vmatpush2.msra.mxu0 0.0
    %672 = vmatprep.subr.mxu0 0.0
    %673 = vmatpush2.msra.mxu0 0.0
    %674 = vmatprep.subr.mxu0 0.0
    %675 = vmatpush2.msra.mxu0 0.0
    %676 = vmatprep.subr.mxu0 0.0
    %677 = vmatpush2.msra.mxu0 0.0
    %678 = vmatprep.subr.mxu0 0.0
    %679 = vmatpush2.msra.mxu0 0.0
    %680 = vmatprep.subr.mxu0 0.0
    %681 = vmatpush2.msra.mxu0 0.0
    %682 = vmatprep.subr.mxu0 0.0
    %683 = vmatpush2.msra.mxu0 0.0
    %684 = vmatprep.subr.mxu0 0.0
    %685 = vmatpush2.msra.mxu0 0.0
    %686 = vmatprep.subr.mxu0 0.0
    %687 = vmatpush2.msra.mxu0 0.0
    %688 = vmatprep.subr.mxu0 0.0
    %689 = vmatpush2.msra.mxu0 0.0
    %690 = vmatprep.subr.mxu0 0.0
    %691 = vmatpush2.msra.mxu0 0.0
    %692 = vmatprep.subr.mxu0 0.0
    %693 = vmatpush2.msra.mxu0 0.0
    %694 = vmatprep.subr.mxu0 0.0
    %695 = vmatpush2.msra.mxu0 0.0
    %696 = vmatprep.subr.mxu0 0.0
    %697 = vmatpush2.msra.mxu0 0.0
    %698 = vmatprep.subr.mxu0 0.0
    %699 = vmatpush2.msra.mxu0 0.0
    %700 = vmatprep.mubr.f32.mxu0 0.0
    %701 = vmatmul.mubr.f32.gmra.mxu0 %v635
    %v702 = vpop.f32.mrf.mxu0
    %v703 = vadd.f32 0.0, %v702
    %v704 = vpop.f32.mrf.mxu0
    %705 = vdwg.mxu0
    %v706 = vadd.f32 %v179, %v703
    %v707 = vtanh.pop %v706
    %708 = vmatprep.subr.mxu0 0.0
    %709 = vmatpush1.msra.mxu0 %v202
    %710 = vmatprep.subr.mxu0 0.0
    %711 = vmatpush1.msra.mxu0 %v201
    %712 = vmatprep.subr.mxu0 0.0
    %713 = vmatpush1.msra.mxu0 %v200
    %714 = vmatprep.subr.mxu0 0.0
    %715 = vmatpush1.msra.mxu0 %v199
    %716 = vmatprep.subr.mxu0 0.0
    %717 = vmatpush1.msra.mxu0 %v198
    %718 = vmatprep.subr.mxu0 0.0
    %719 = vmatpush1.msra.mxu0 %v197
    %720 = vmatprep.subr.mxu0 0.0
    %721 = vmatpush1.msra.mxu0 %v196
    %722 = vmatprep.subr.mxu0 0.0
    %723 = vmatpush1.msra.mxu0 %v195
    %724 = vmatprep.subr.mxu0 0.0
    %725 = vmatpush1.msra.mxu0 %v194
    %726 = vmatprep.subr.mxu0 0.0
    %727 = vmatpush1.msra.mxu0 %v193
    %728 = vmatprep.subr.mxu0 0.0
    %729 = vmatpush1.msra.mxu0 %v192
    %730 = vmatprep.subr.mxu0 0.0
    %731 = vmatpush1.msra.mxu0 %v191
    %732 = vmatprep.subr.mxu0 0.0
    %733 = vmatpush1.msra.mxu0 %v190
    %734 = vmatprep.subr.mxu0 0.0
    %735 = vmatpush1.msra.mxu0 %v189
    %736 = vmatprep.subr.mxu0 0.0
    %737 = vmatpush1.msra.mxu0 %v188
    %738 = vmatprep.subr.mxu0 0.0
    %739 = vmatpush1.msra.mxu0 %v187
    %740 = vmatprep.subr.mxu0 0.0
    %741 = vmatpush2.msra.mxu0 0.0
    %742 = vmatprep.subr.mxu0 0.0
    %743 = vmatpush2.msra.mxu0 0.0
    %744 = vmatprep.subr.mxu0 0.0
    %745 = vmatpush2.msra.mxu0 0.0
    %746 = vmatprep.subr.mxu0 0.0
    %747 = vmatpush2.msra.mxu0 0.0
    %748 = vmatprep.subr.mxu0 0.0
    %749 = vmatpush2.msra.mxu0 0.0
    %750 = vmatprep.subr.mxu0 0.0
    %751 = vmatpush2.msra.mxu0 0.0
    %752 = vmatprep.subr.mxu0 0.0
    %753 = vmatpush2.msra.mxu0 0.0
    %754 = vmatprep.subr.mxu0 0.0
    %755 = vmatpush2.msra.mxu0 0.0
    %756 = vmatprep.subr.mxu0 0.0
    %757 = vmatpush2.msra.mxu0 0.0
    %758 = vmatprep.subr.mxu0 0.0
    %759 = vmatpush2.msra.mxu0 0.0
    %760 = vmatprep.subr.mxu0 0.0
    %761 = vmatpush2.msra.mxu0 0.0
    %762 = vmatprep.subr.mxu0 0.0
    %763 = vmatpush2.msra.mxu0 0.0
    %764 = vmatprep.subr.mxu0 0.0
    %765 = vmatpush2.msra.mxu0 0.0
    %766 = vmatprep.subr.mxu0 0.0
    %767 = vmatpush2.msra.mxu0 0.0
    %768 = vmatprep.subr.mxu0 0.0
    %769 = vmatpush2.msra.mxu0 0.0
    %770 = vmatprep.subr.mxu0 0.0
    %771 = vmatpush2.msra.mxu0 0.0
    %772 = vmatprep.mubr.f32.mxu0 0.0
    %773 = vmatmul.mubr.f32.gmra.mxu0 %v707
    %v774 = vpop.f32.mrf.mxu0
    %v775 = vadd.f32 0.0, %v774
    %v776 = vpop.f32.mrf.mxu0
    %777 = vdwg.mxu0
    %v778 = vadd.f32 %v184, %v775
    %v779 = vtanh.pop %v778
    %780 = vst [vmem:[#allocation2] sm:$0xff] %v779
    // Predicated region
    $region26: #{tpu_custom_call.1} parent=1 // pred_check
      %p781 = pneg %p32
    $region27: #{tpu_custom_call.1} parent=1 // pred_check_branch
      %783 = sbr.rel (%p781) target = $region29
    $region28: #{tpu_custom_call.1} parent=1 // pred_region
      %784 = vst [vmem:[#allocation6] sm:$0xff] %v779
    $region29: #{tpu_custom_call.1} parent=1 // pred_fallthru
      _
    // Predicated region
    $region30: #{tpu_custom_call.1} parent=1 // pred_check
      _
    $region31: #{tpu_custom_call.1} parent=1 // pred_check_branch
      %786 = sbr.rel (0) target = $region33
    $region32: #{tpu_custom_call.1} parent=1 // pred_region
      %s788 = ssub.s32 128, 128
      %789 = vsyncadd [#allocation5], %s788
      %s791 = sshll.u32 [#allocation6], 4
      %s792 = int_to_ptr.vmem [resolvable:$true] %s791
      %794 = dma.vmem_to_hbm [thread:$0]  %s792, 128, %s4, [#allocation5]
    $region33: #{tpu_custom_call.1} parent=1 // pred_fallthru
      _
    // Predicated region
    $region34: #{tpu_custom_call.1} parent=1 // pred_check
      _
    $region35: #{tpu_custom_call.1} parent=1 // pred_check_branch
      %796 = sbr.rel (0) target = $region37
    $region36: #{tpu_custom_call.1} parent=1 // pred_region
      %797 = dma.done [#allocation5], 128
    $region37: #{tpu_custom_call.1} parent=1 // pred_fallthru
      _
    %798 = vsyncpa [#allocation4], 1
    %799 = vsyncpa [#allocation5], 1

</llo_original>
